<compile_context>
chip_gen: v7x
topology: tpu7x:2x2x1
jax: 0.10.0
libtpu: 0.0.40
codegen_flags: <defaults>
</compile_context>

<pallas_src>
import numpy as np

import jax
import jax.numpy as jnp
from jax.experimental import pallas as pl
from jax.experimental.pallas import tpu as pltpu

LANE = 128        # lane-dense feature width (features / hidden / classes padded here)
NODE_TILE = 128   # nodes per chunk (one (128,128) A tile per grid step)
GRAPH_TILE = 8    # max graphs per chunk (sublane-aligned pooled-output rows)


# ----------------------------------------------------------------------------
# Fused Pallas kernel: one graph-chunk per grid step, all layers fused.
# ----------------------------------------------------------------------------
def _make_fused_kernel(num_layers: int):
    """Kernel ref order:
       (a_ref, x_ref, p_ref, [w_i, shift_i] * num_layers, w_last, b_mask, out_ref)
    """

    def kernel(a_ref, x_ref, p_ref, *rest):
        out_ref = rest[-1]

        a = a_ref[...]                           # (NODE_TILE, NODE_TILE) bf16
        h = x_ref[...]                           # (NODE_TILE, LANE)      bf16

        idx = 0
        for _ in range(num_layers):
            w = rest[idx][...]                   # (LANE, LANE) bf16, BN scale folded in
            t = rest[idx + 1][...]               # (1, LANE)    f32,  BN shift + conv bias
            idx += 2
            xw = jnp.dot(h, w, preferred_element_type=jnp.float32)
            hh = jnp.dot(a, xw.astype(jnp.bfloat16),
                         preferred_element_type=jnp.float32)
            hh = jnp.maximum(hh + t, 0.0)        # eval-mode BN + ReLU, f32 on VPU
            h = hh.astype(jnp.bfloat16)          # bf16 operand for the next MXU pass
            # TODO(synk): dropout is a no-op in eval mode (training=False), omitted.

        # Final GCN layer (no BN/ReLU).  Its bias is per-output-channel and the
        # mean-pool rows sum to 1, so it is added AFTER pooling; its padded
        # lanes carry -1e30 so log_softmax masking comes for free.
        w_last = rest[idx][...]                  # (LANE, LANE) bf16
        b_mask = rest[idx + 1][...]              # (1, LANE)    f32
        xw = jnp.dot(h, w_last, preferred_element_type=jnp.float32)
        h_out = jnp.dot(a, xw.astype(jnp.bfloat16),
                        preferred_element_type=jnp.float32)

        # Global mean pool (P rows hold 1/|graph| weights) + log_softmax.
        pooled = jnp.dot(p_ref[...], h_out.astype(jnp.bfloat16),
                         preferred_element_type=jnp.float32) + b_mask
        m = jnp.max(pooled, axis=1, keepdims=True)
        z = pooled - m
        lse = jnp.log(jnp.sum(jnp.exp(z), axis=1, keepdims=True))
        out_ref[...] = z - lse                   # (GRAPH_TILE, LANE) f32

    return kernel


# ----------------------------------------------------------------------------
# Glue: parameter init, graph preprocessing, chunking, forward wrapper.
# ----------------------------------------------------------------------------
def _pad_to(arr, shape):
    pads = [(0, s - d) for d, s in zip(arr.shape, shape)]
    return jnp.pad(arr, pads)


def init_params(key, num_features, num_classes, hidden_dim=16, num_layers=2):
    params = {"convs": [], "bns": []}
    dims = [num_features] + [hidden_dim] * num_layers + [num_classes]
    for i in range(num_layers + 1):
        key, kw, kb = jax.random.split(key, 3)
        bound = 1.0 / jnp.sqrt(dims[i])
        w = jax.random.uniform(kw, (dims[i], dims[i + 1]), jnp.float32, -bound, bound)
        b = jax.random.uniform(kb, (dims[i + 1],), jnp.float32, -bound, bound)
        params["convs"].append((w, b))
    for _ in range(num_layers):
        key, kg, kbeta = jax.random.split(key, 3)
        gamma = 1.0 + 0.1 * jax.random.normal(kg, (hidden_dim,), jnp.float32)
        beta = 0.1 * jax.random.normal(kbeta, (hidden_dim,), jnp.float32)
        running_mean = jnp.zeros((hidden_dim,), jnp.float32)
        running_var = jnp.ones((hidden_dim,), jnp.float32)
        params["bns"].append((gamma, beta, running_mean, running_var))
    return params


def build_normalized_adjacency(edge_index, num_nodes):
    # A_hat = D^{-1/2} (A + I) D^{-1/2}, as in GCNConv (add_self_loops=True)
    src, dst = edge_index[0], edge_index[1]
    a = jnp.zeros((num_nodes, num_nodes), jnp.float32)
    a = a.at[src, dst].set(1.0)
    a = a.at[dst, src].set(1.0)                                       # undirected
    a = a.at[jnp.arange(num_nodes), jnp.arange(num_nodes)].set(1.0)   # self-loops
    deg = jnp.sum(a, axis=1)
    d_inv_sqrt = jnp.where(deg > 0, 1.0 / jnp.sqrt(deg), 0.0)
    return d_inv_sqrt[:, None] * a * d_inv_sqrt[None, :]


def build_pool_matrix(batch, num_graphs):
    # P[g, n] = 1/|graph g| if node n belongs to graph g else 0
    onehot = (batch[None, :] == jnp.arange(num_graphs)[:, None]).astype(jnp.float32)
    counts = jnp.sum(onehot, axis=1, keepdims=True)
    return onehot / jnp.maximum(counts, 1.0)


def _chunk_graphs(batch_np, num_graphs):
    """Greedily group consecutive graphs into chunks of <= NODE_TILE nodes and
    <= GRAPH_TILE graphs.  Returns (chunks, counts, offsets)."""
    counts = np.bincount(batch_np, minlength=num_graphs)
    offsets = np.concatenate([[0], np.cumsum(counts)]).astype(np.int64)
    assert np.all(np.diff(batch_np) >= 0), "batch must be PyG-style contiguous"
    assert counts.max() <= NODE_TILE, "graph larger than NODE_TILE"
    # TODO(synk): graphs with > NODE_TILE nodes would need a multi-tile path.
    chunks = []
    g = 0
    while g < num_graphs:
        g0, nodes = g, 0
        while (g < num_graphs and (g - g0) < GRAPH_TILE
               and nodes + counts[g] <= NODE_TILE):
            nodes += int(counts[g])
            g += 1
        chunks.append((g0, g))
    return chunks, counts, offsets


def gcn_graphnet_forward(params, x, a_hat, batch, num_graphs, num_layers=2):
    """Fused forward.  Returns log-probabilities of shape [num_graphs, num_classes]."""
    eps = 1e-5
    num_features = x.shape[1]
    num_classes = params["convs"][-1][0].shape[1]

    # --- host-side chunking (block-diagonal A => chunks are independent) ------
    batch_np = np.asarray(jax.device_get(batch))
    chunks, counts, offsets = _chunk_graphs(batch_np, num_graphs)
    num_chunks = len(chunks)

    a_np = np.asarray(jax.device_get(a_hat), dtype=np.float32)
    x_np = np.asarray(jax.device_get(x), dtype=np.float32)

    a_all = np.zeros((num_chunks, NODE_TILE, NODE_TILE), np.float32)
    x_all = np.zeros((num_chunks, NODE_TILE, LANE), np.float32)
    p_all = np.zeros((num_chunks, GRAPH_TILE, NODE_TILE), np.float32)
    for c, (g0, g1) in enumerate(chunks):
        n0, n1 = int(offsets[g0]), int(offsets[g1])
        nn = n1 - n0
        a_all[c, :nn, :nn] = a_np[n0:n1, n0:n1]
        x_all[c, :nn, :num_features] = x_np[n0:n1]
        for g in range(g0, g1):
            s, e = int(offsets[g]) - n0, int(offsets[g + 1]) - n0
            p_all[c, g - g0, s:e] = 1.0 / float(counts[g])

    a_all = jnp.asarray(a_all, dtype=jnp.bfloat16)
    x_all = jnp.asarray(x_all, dtype=jnp.bfloat16)
    p_all = jnp.asarray(p_all, dtype=jnp.bfloat16)   # bf16 pooling matmul (review)

    # --- parameter packing: fold BN into the conv weight / shift --------------
    args = [a_all, x_all, p_all]
    in_specs = [
        pl.BlockSpec((None, NODE_TILE, NODE_TILE), lambda c: (c, 0, 0)),   # A chunk
        pl.BlockSpec((None, NODE_TILE, LANE), lambda c: (c, 0, 0)),        # X chunk
        pl.BlockSpec((None, GRAPH_TILE, NODE_TILE), lambda c: (c, 0, 0)),  # P chunk
    ]
    for i in range(num_layers):
        w, b = params["convs"][i]
        gamma, beta, rmean, rvar = params["bns"][i]
        scale = gamma / jnp.sqrt(rvar + eps)
        shift = beta - rmean * scale + b * scale      # conv bias folded into BN shift
        w_eff = w * scale[None, :]                    # BN scale folded into weight
        c_out = w.shape[1]
        args.append(_pad_to(w_eff, (LANE, LANE)).astype(jnp.bfloat16))
        args.append(_pad_to(shift.reshape(1, c_out), (1, LANE)).astype(jnp.float32))
        in_specs.append(pl.BlockSpec((LANE, LANE), lambda c: (0, 0)))
        in_specs.append(pl.BlockSpec((1, LANE), lambda c: (0, 0)))

    w, b = params["convs"][-1]
    # last-layer bias with -1e30 in padded lanes => free log_softmax masking
    b_mask = jnp.full((1, LANE), -1e30, jnp.float32)
    b_mask = b_mask.at[0, :num_classes].set(b)
    args.append(_pad_to(w, (LANE, LANE)).astype(jnp.bfloat16))
    args.append(b_mask)
    in_specs.append(pl.BlockSpec((LANE, LANE), lambda c: (0, 0)))
    in_specs.append(pl.BlockSpec((1, LANE), lambda c: (0, 0)))

    out_specs = pl.BlockSpec((GRAPH_TILE, LANE), lambda c: (c, 0))
    out_shape = jax.ShapeDtypeStruct((num_chunks * GRAPH_TILE, LANE), jnp.float32)

    # --- VMEM budget: per-step working set, double-buffered, plus f32 temps ---
    in_bytes = (NODE_TILE * NODE_TILE + NODE_TILE * LANE + GRAPH_TILE * NODE_TILE) * 2
    w_bytes = (num_layers + 1) * (LANE * LANE * 2 + LANE * 4)
    out_bytes = GRAPH_TILE * LANE * 4
    temp_bytes = 6 * NODE_TILE * LANE * 4
    vmem_limit = int(2 * (in_bytes + w_bytes + out_bytes) + temp_bytes + (8 << 20))

    kernel = _make_fused_kernel(num_layers)
    out_padded = pl.pallas_call(
        kernel,
        out_shape=out_shape,
        grid=(num_chunks,),
        in_specs=in_specs,
        out_specs=out_specs,
        compiler_params=pltpu.CompilerParams(
            dimension_semantics=("parallel",),       # chunks are independent
            vmem_limit_bytes=vmem_limit,
        ),
    )(*args)

    # Gather the real graph rows / class lanes back out of the padded slab.
    rows = []
    for c, (g0, g1) in enumerate(chunks):
        rows.extend(c * GRAPH_TILE + i for i in range(g1 - g0))
    row_idx = jnp.asarray(rows, dtype=jnp.int32)
    return out_padded[row_idx, :num_classes]


def gcn_graphnet_forward_ref(params, x, a_hat, pool_mat, num_layers=2):
    """Pure-JAX f32 reference for correctness checking."""
    eps = 1e-5
    h = x
    for i in range(num_layers):
        w, b = params["convs"][i]
        gamma, beta, rmean, rvar = params["bns"][i]
        h = a_hat @ (h @ w) + b
        h = (h - rmean) / jnp.sqrt(rvar + eps) * gamma + beta
        h = jnp.maximum(h, 0.0)
    w, b = params["convs"][-1]
    h = a_hat @ (h @ w) + b
    pooled = pool_mat @ h
    return jax.nn.log_softmax(pooled, axis=1)


if __name__ == "__main__":
    key = jax.random.PRNGKey(0)

    # Small, ENZYMES-like batched shapes: 4 graphs, ~48 nodes each
    num_features = 8
    hidden_dim = 16
    num_classes = 6
    num_layers = 2
    graph_sizes = [48, 48, 40, 56]           # -> 2 chunks of <=128 nodes, grid=(2,)
    num_graphs = len(graph_sizes)
    num_nodes = sum(graph_sizes)

    key, kx, kp = jax.random.split(key, 3)
    x = jax.random.normal(kx, (num_nodes, num_features), jnp.float32)

    # Block-diagonal edge structure: edges only within each graph (PyG batching).
    edges = []
    off = 0
    for cnt in graph_sizes:
        key, ke = jax.random.split(key)
        e = jax.random.randint(ke, (2, 2 * cnt), 0, cnt) + off
        edges.append(e)
        off += cnt
    edge_index = jnp.concatenate(edges, axis=1)
    batch = jnp.concatenate([jnp.full((cnt,), g, jnp.int32)
                             for g, cnt in enumerate(graph_sizes)])

    params = init_params(kp, num_features, num_classes, hidden_dim, num_layers)
    a_hat = build_normalized_adjacency(edge_index, num_nodes)

    out = gcn_graphnet_forward(params, x, a_hat, batch, num_graphs, num_layers)
    out = jax.block_until_ready(out)

    assert out.shape == (num_graphs, num_classes)
    # log_softmax rows should sum (in prob space) to ~1; padded lanes are killed
    # by the -1e30 bias mask, so the leakage is negligible.
    assert jnp.allclose(jnp.sum(jnp.exp(out), axis=1), 1.0, atol=1e-4)

    # bf16 MXU operands (A, H, W, P) with f32 accumulation vs f32 reference.
    pool_mat = build_pool_matrix(batch, num_graphs)
    ref = gcn_graphnet_forward_ref(params, x, a_hat, pool_mat, num_layers)
    err = float(jnp.max(jnp.abs(out - ref)))
    assert jnp.allclose(out, ref, atol=7.5e-2), err
    print("KERNEL_OK")
</pallas_src>

<mosaic_0001>
module attributes {stable_mosaic.version = 11 : i64} {
  func.func @kernel(%arg0: i32, %arg1: memref<1x128x128xbf16, #tpu.memory_space<vmem>>, %arg2: memref<1x128x128xbf16, #tpu.memory_space<vmem>>, %arg3: memref<1x8x128xbf16, #tpu.memory_space<vmem>>, %arg4: memref<128x128xbf16, #tpu.memory_space<vmem>>, %arg5: memref<1x128xf32, #tpu.memory_space<vmem>>, %arg6: memref<128x128xbf16, #tpu.memory_space<vmem>>, %arg7: memref<1x128xf32, #tpu.memory_space<vmem>>, %arg8: memref<128x128xbf16, #tpu.memory_space<vmem>>, %arg9: memref<1x128xf32, #tpu.memory_space<vmem>>, %arg10: memref<8x128xf32, #tpu.memory_space<vmem>>) attributes {dimension_semantics = [#tpu.dimension_semantics<parallel>], iteration_bounds = array<i64: 2>, scalar_prefetch = 0 : i64, scratch_operands = 0 : i64, tpu.core_type = #tpu.core_type<tc>, window_params = [{transform_indices = @transform_0, window_bounds = array<i64: 1, 128, 128>}, {transform_indices = @transform_1, window_bounds = array<i64: 1, 128, 128>}, {transform_indices = @transform_2, window_bounds = array<i64: 1, 8, 128>}, {pipeline_mode = #tpu.pipeline_mode<synchronous>, transform_indices = @transform_3, window_bounds = array<i64: 128, 128>}, {pipeline_mode = #tpu.pipeline_mode<synchronous>, transform_indices = @transform_4, window_bounds = array<i64: 1, 128>}, {pipeline_mode = #tpu.pipeline_mode<synchronous>, transform_indices = @transform_5, window_bounds = array<i64: 128, 128>}, {pipeline_mode = #tpu.pipeline_mode<synchronous>, transform_indices = @transform_6, window_bounds = array<i64: 1, 128>}, {pipeline_mode = #tpu.pipeline_mode<synchronous>, transform_indices = @transform_7, window_bounds = array<i64: 128, 128>}, {pipeline_mode = #tpu.pipeline_mode<synchronous>, transform_indices = @transform_8, window_bounds = array<i64: 1, 128>}, {transform_indices = @transform_9, window_bounds = array<i64: 8, 128>}]} {
    %c0 = arith.constant 0 : index
    %c0_0 = arith.constant 0 : index
    %c0_1 = arith.constant 0 : index
    %0 = vector.load %arg1[%c0, %c0_0, %c0_1] : memref<1x128x128xbf16, #tpu.memory_space<vmem>>, vector<1x128x128xbf16>
    %1 = vector.shape_cast %0 : vector<1x128x128xbf16> to vector<128x128xbf16>
    %c0_2 = arith.constant 0 : index
    %c0_3 = arith.constant 0 : index
    %c0_4 = arith.constant 0 : index
    %2 = vector.load %arg2[%c0_2, %c0_3, %c0_4] : memref<1x128x128xbf16, #tpu.memory_space<vmem>>, vector<1x128x128xbf16>
    %3 = vector.shape_cast %2 : vector<1x128x128xbf16> to vector<128x128xbf16>
    %c0_5 = arith.constant 0 : index
    %c0_6 = arith.constant 0 : index
    %4 = vector.load %arg4[%c0_5, %c0_6] : memref<128x128xbf16, #tpu.memory_space<vmem>>, vector<128x128xbf16>
    %c0_7 = arith.constant 0 : index
    %c0_8 = arith.constant 0 : index
    %5 = vector.load %arg5[%c0_7, %c0_8] : memref<1x128xf32, #tpu.memory_space<vmem>>, vector<1x128xf32>
    %cst = arith.constant dense<0.000000e+00> : vector<128x128xf32>
    %6 = tpu.matmul %3, %4, %cst {dimension_numbers = #tpu.dot_dimension_numbers<[1], [0], [0], [1], [0, 0, 1, 1], [], []>} : vector<128x128xbf16>, vector<128x128xbf16>, vector<128x128xf32> -> vector<128x128xf32>
    %7 = arith.truncf %6 : vector<128x128xf32> to vector<128x128xbf16>
    %cst_9 = arith.constant dense<0.000000e+00> : vector<128x128xf32>
    %8 = tpu.matmul %1, %7, %cst_9 {dimension_numbers = #tpu.dot_dimension_numbers<[1], [0], [0], [1], [0, 0, 1, 1], [], []>} : vector<128x128xbf16>, vector<128x128xbf16>, vector<128x128xf32> -> vector<128x128xf32>
    %9 = vector.broadcast %5 : vector<1x128xf32> to vector<128x128xf32>
    %10 = arith.addf %8, %9 : vector<128x128xf32>
    %cst_10 = arith.constant 0.000000e+00 : f32
    %11 = vector.broadcast %cst_10 : f32 to vector<128x128xf32>
    %12 = arith.maximumf %10, %11 : vector<128x128xf32>
    %13 = arith.truncf %12 : vector<128x128xf32> to vector<128x128xbf16>
    %c0_11 = arith.constant 0 : index
    %c0_12 = arith.constant 0 : index
    %14 = vector.load %arg6[%c0_11, %c0_12] : memref<128x128xbf16, #tpu.memory_space<vmem>>, vector<128x128xbf16>
    %c0_13 = arith.constant 0 : index
    %c0_14 = arith.constant 0 : index
    %15 = vector.load %arg7[%c0_13, %c0_14] : memref<1x128xf32, #tpu.memory_space<vmem>>, vector<1x128xf32>
    %cst_15 = arith.constant dense<0.000000e+00> : vector<128x128xf32>
    %16 = tpu.matmul %13, %14, %cst_15 {dimension_numbers = #tpu.dot_dimension_numbers<[1], [0], [0], [1], [0, 0, 1, 1], [], []>} : vector<128x128xbf16>, vector<128x128xbf16>, vector<128x128xf32> -> vector<128x128xf32>
    %17 = arith.truncf %16 : vector<128x128xf32> to vector<128x128xbf16>
    %cst_16 = arith.constant dense<0.000000e+00> : vector<128x128xf32>
    %18 = tpu.matmul %1, %17, %cst_16 {dimension_numbers = #tpu.dot_dimension_numbers<[1], [0], [0], [1], [0, 0, 1, 1], [], []>} : vector<128x128xbf16>, vector<128x128xbf16>, vector<128x128xf32> -> vector<128x128xf32>
    %19 = vector.broadcast %15 : vector<1x128xf32> to vector<128x128xf32>
    %20 = arith.addf %18, %19 : vector<128x128xf32>
    %cst_17 = arith.constant 0.000000e+00 : f32
    %21 = vector.broadcast %cst_17 : f32 to vector<128x128xf32>
    %22 = arith.maximumf %20, %21 : vector<128x128xf32>
    %23 = arith.truncf %22 : vector<128x128xf32> to vector<128x128xbf16>
    %c0_18 = arith.constant 0 : index
    %c0_19 = arith.constant 0 : index
    %24 = vector.load %arg8[%c0_18, %c0_19] : memref<128x128xbf16, #tpu.memory_space<vmem>>, vector<128x128xbf16>
    %c0_20 = arith.constant 0 : index
    %c0_21 = arith.constant 0 : index
    %25 = vector.load %arg9[%c0_20, %c0_21] : memref<1x128xf32, #tpu.memory_space<vmem>>, vector<1x128xf32>
    %cst_22 = arith.constant dense<0.000000e+00> : vector<128x128xf32>
    %26 = tpu.matmul %23, %24, %cst_22 {dimension_numbers = #tpu.dot_dimension_numbers<[1], [0], [0], [1], [0, 0, 1, 1], [], []>} : vector<128x128xbf16>, vector<128x128xbf16>, vector<128x128xf32> -> vector<128x128xf32>
    %27 = arith.truncf %26 : vector<128x128xf32> to vector<128x128xbf16>
    %cst_23 = arith.constant dense<0.000000e+00> : vector<128x128xf32>
    %28 = tpu.matmul %1, %27, %cst_23 {dimension_numbers = #tpu.dot_dimension_numbers<[1], [0], [0], [1], [0, 0, 1, 1], [], []>} : vector<128x128xbf16>, vector<128x128xbf16>, vector<128x128xf32> -> vector<128x128xf32>
    %c0_24 = arith.constant 0 : index
    %c0_25 = arith.constant 0 : index
    %c0_26 = arith.constant 0 : index
    %29 = vector.load %arg3[%c0_24, %c0_25, %c0_26] : memref<1x8x128xbf16, #tpu.memory_space<vmem>>, vector<1x8x128xbf16>
    %30 = vector.shape_cast %29 : vector<1x8x128xbf16> to vector<8x128xbf16>
    %31 = arith.truncf %28 : vector<128x128xf32> to vector<128x128xbf16>
    %cst_27 = arith.constant dense<0.000000e+00> : vector<8x128xf32>
    %32 = tpu.matmul %30, %31, %cst_27 {dimension_numbers = #tpu.dot_dimension_numbers<[1], [0], [0], [1], [0, 0, 1, 1], [], []>} : vector<8x128xbf16>, vector<128x128xbf16>, vector<8x128xf32> -> vector<8x128xf32>
    %33 = vector.broadcast %25 : vector<1x128xf32> to vector<8x128xf32>
    %34 = arith.addf %32, %33 : vector<8x128xf32>
    %cst_28 = arith.constant dense<0xFF800000> : vector<8xf32>
    %35 = vector.multi_reduction <maximumf>, %34, %cst_28 [1] : vector<8x128xf32> to vector<8xf32>
    %36 = vector.shape_cast %35 : vector<8xf32> to vector<8x1xf32>
    %37 = vector.broadcast %36 : vector<8x1xf32> to vector<8x128xf32>
    %38 = arith.subf %34, %37 : vector<8x128xf32>
    %39 = math.exp %38 : vector<8x128xf32>
    %cst_29 = arith.constant dense<0.000000e+00> : vector<8xf32>
    %40 = vector.multi_reduction <add>, %39, %cst_29 [1] : vector<8x128xf32> to vector<8xf32>
    %41 = vector.shape_cast %40 : vector<8xf32> to vector<8x1xf32>
    %42 = math.log %41 : vector<8x1xf32>
    %43 = vector.broadcast %42 : vector<8x1xf32> to vector<8x128xf32>
    %44 = arith.subf %38, %43 : vector<8x128xf32>
    %c0_30 = arith.constant 0 : index
    %c0_31 = arith.constant 0 : index
    %45 = vector.load %arg10[%c0_30, %c0_31] : memref<8x128xf32, #tpu.memory_space<vmem>>, vector<8x128xf32>
    tpu.vector_store %arg10[%c0_30, %c0_31], %44 {strides = array<i32>} : memref<8x128xf32, #tpu.memory_space<vmem>>, vector<8x128xf32>,
    return
  }
  func.func @transform_0(%arg0: i32) -> (i32, i32, i32) {
    %c0_i32 = arith.constant 0 : i32
    %c0_i32_0 = arith.constant 0 : i32
    %c0_i32_1 = arith.constant 0 : i32
    return %arg0, %c0_i32, %c0_i32_0 : i32, i32, i32
  }
  func.func @transform_1(%arg0: i32) -> (i32, i32, i32) {
    %c0_i32 = arith.constant 0 : i32
    %c0_i32_0 = arith.constant 0 : i32
    %c0_i32_1 = arith.constant 0 : i32
    return %arg0, %c0_i32, %c0_i32_0 : i32, i32, i32
  }
  func.func @transform_2(%arg0: i32) -> (i32, i32, i32) {
    %c0_i32 = arith.constant 0 : i32
    %c0_i32_0 = arith.constant 0 : i32
    %c0_i32_1 = arith.constant 0 : i32
    return %arg0, %c0_i32, %c0_i32_0 : i32, i32, i32
  }
  func.func @transform_3(%arg0: i32) -> (i32, i32) {
    %c0_i32 = arith.constant 0 : i32
    %c0_i32_0 = arith.constant 0 : i32
    %c0_i32_1 = arith.constant 0 : i32
    return %c0_i32, %c0_i32_0 : i32, i32
  }
  func.func @transform_4(%arg0: i32) -> (i32, i32) {
    %c0_i32 = arith.constant 0 : i32
    %c0_i32_0 = arith.constant 0 : i32
    %c0_i32_1 = arith.constant 0 : i32
    return %c0_i32, %c0_i32_0 : i32, i32
  }
  func.func @transform_5(%arg0: i32) -> (i32, i32) {
    %c0_i32 = arith.constant 0 : i32
    %c0_i32_0 = arith.constant 0 : i32
    %c0_i32_1 = arith.constant 0 : i32
    return %c0_i32, %c0_i32_0 : i32, i32
  }
  func.func @transform_6(%arg0: i32) -> (i32, i32) {
    %c0_i32 = arith.constant 0 : i32
    %c0_i32_0 = arith.constant 0 : i32
    %c0_i32_1 = arith.constant 0 : i32
    return %c0_i32, %c0_i32_0 : i32, i32
  }
  func.func @transform_7(%arg0: i32) -> (i32, i32) {
    %c0_i32 = arith.constant 0 : i32
    %c0_i32_0 = arith.constant 0 : i32
    %c0_i32_1 = arith.constant 0 : i32
    return %c0_i32, %c0_i32_0 : i32, i32
  }
  func.func @transform_8(%arg0: i32) -> (i32, i32) {
    %c0_i32 = arith.constant 0 : i32
    %c0_i32_0 = arith.constant 0 : i32
    %c0_i32_1 = arith.constant 0 : i32
    return %c0_i32, %c0_i32_0 : i32, i32
  }
  func.func @transform_9(%arg0: i32) -> (i32, i32) {
    %c0_i32 = arith.constant 0 : i32
    %c0_i32_0 = arith.constant 0 : i32
    return %arg0, %c0_i32 : i32, i32
  }
}

</mosaic_0001>

<llo_original>
// kernel: tpu_custom_call.1
$region0: #{tpu_custom_call.1}
  #allocation0 [shape = 'u32[]', space=smem, size = 0x4, offset = 0x4, fixed_abs, tag = 'smem constant byte address 0x4 - core index']
  #allocation1 [shape = 'u32[144,128]{1,0:T(1,128)}', space=vmem, size = 0x12000, scoped, tag = 'internal scratch']
  %s0 = inlined_call_operand.hbm [shape: bf16[2,128,128], index: 0, kind: input, shape index: {}]
  %s1 = inlined_call_operand.hbm [shape: bf16[2,128,128], index: 1, kind: input, shape index: {}]
  %s2 = inlined_call_operand.hbm [shape: bf16[2,8,128], index: 2, kind: input, shape index: {}]
  %s3 = inlined_call_operand.hbm [shape: bf16[128,128], index: 3, kind: input, shape index: {}]
  %s4 = inlined_call_operand.vmem [shape: f32[1,128], index: 4, kind: input, shape index: {}]
  %s5 = inlined_call_operand.hbm [shape: bf16[128,128], index: 5, kind: input, shape index: {}]
  %s6 = inlined_call_operand.vmem [shape: f32[1,128], index: 6, kind: input, shape index: {}]
  %s7 = inlined_call_operand.hbm [shape: bf16[128,128], index: 7, kind: input, shape index: {}]
  %s8 = inlined_call_operand.vmem [shape: f32[1,128], index: 8, kind: input, shape index: {}]
  %s9 = inlined_call_operand.hbm [shape: f32[16,128], index: 9, kind: output, shape index: {}]
  %s10 = sld [smem:[#allocation0]]
  $region93: #{tpu_custom_call.1} parent=0
    _
  %s12 = ssub.s32 1, %s10
  %s13 = scalar_select 0, %s12, %s10
  $region1: #{tpu_custom_call.1} parent=0
    #allocation2 [shape = 'u8[65536]{0}', space=vmem, size = 0x10000, scoped, tag = 'input window, operand 0']
    #allocation3 [shape = 's32[2]{0}', space=sflag, size = 0x8, scoped, tag = 'scoped memory for tpu_custom_call.1']
    #allocation4 [shape = 's32[2]{0}', space=sflag, size = 0x8, scoped, tag = 'scoped memory for tpu_custom_call.1']
    #allocation5 [shape = 'u8[65536]{0}', space=vmem, size = 0x10000, scoped, tag = 'input window, operand 1']
    #allocation6 [shape = 's32[2]{0}', space=sflag, size = 0x8, scoped, tag = 'scoped memory for tpu_custom_call.1']
    #allocation7 [shape = 'u8[4096]{0}', space=vmem, size = 0x1000, scoped, tag = 'input window, operand 2']
    #allocation8 [shape = 'u8[32768]{0}', space=vmem, size = 0x8000, scoped, tag = 'input window, operand 3, single buffered']
    #allocation9 [shape = 's32[1]{0}', space=sflag, size = 0x4, scoped, tag = 'scoped memory for tpu_custom_call.1']
    #allocation10 [shape = 'u8[32768]{0}', space=vmem, size = 0x8000, scoped, tag = 'input window, operand 5, single buffered']
    #allocation11 [shape = 'u8[32768]{0}', space=vmem, size = 0x8000, scoped, tag = 'input window, operand 7, single buffered']
    #allocation12 [shape = 's32[1]{0}', space=sflag, size = 0x4, scoped, tag = 'scoped memory for tpu_custom_call.1']
    #allocation13 [shape = 'u8[8192]{0}', space=vmem, size = 0x2000, scoped, tag = 'output window, operand 0']
    %14 = vsyncpa [#allocation3], 0
    %s15 = scalar_lea.sflag [#allocation3], 1
    %16 = vsyncpa %s15, 0
    %17 = vsyncpa [#allocation6], 0
    %s18 = scalar_lea.sflag [#allocation6], 1
    %19 = vsyncpa %s18, 0
    %20 = vsyncpa [#allocation9], 0
    %21 = vsyncpa [#allocation12], 0
    %22 = vsyncpa [#allocation4], 0
    %s23 = scalar_lea.sflag [#allocation4], 1
    %24 = vsyncpa %s23, 0
    loop: start=0, step=1, limit=4
    $region2: #{tpu_custom_call.1} parent=1 // loop_pre_header
      _
    $region3: #{tpu_custom_call.1} parent=1 // loop_header
      %s26 = sphi 0, %s30
      %p27 = scmp.ge.s32.totalorder %s26, 4
      %s36 = sphi 0, %s38
      %s39 = sphi 0, %s36
      %s40 = sphi 0, %s39
      %s56 = sphi 0, %s40
      %s62 = sphi 0, %s64
      %s65 = sphi 0, %s62
      %s66 = sphi 0, %s65
      %s82 = sphi 0, %s66
      %s88 = sphi 0, %s90
      %s91 = sphi 0, %s88
      %s92 = sphi 0, %s91
      %s108 = sphi 0, %s92
      %s112 = sphi 0, %s112
      %s114 = sphi 0, %s112
      %s115 = sphi 0, %s114
      %s129 = sphi 0, %s115
      %s133 = sphi 0, %s133
      %s135 = sphi 0, %s133
      %s136 = sphi 0, %s135
      %s150 = sphi 0, %s136
      %s154 = sphi 0, %s154
      %s156 = sphi 0, %s154
      %s157 = sphi 0, %s156
      %s171 = sphi 0, %s157
      %s175 = sphi 0, %s175
      %s177 = sphi 0, %s175
      %s178 = sphi 0, %s177
      %s192 = sphi 0, %s178
      %s196 = sphi 0, %s196
      %s198 = sphi 0, %s196
      %s199 = sphi 0, %s198
      %s213 = sphi 0, %s199
      %s217 = sphi 0, %s217
      %s219 = sphi 0, %s217
      %s220 = sphi 0, %s219
      %s234 = sphi 0, %s220
      %s240 = sphi 0, %s242
      %s243 = sphi 0, %s240
      %s244 = sphi 0, %s243
      %s260 = sphi 0, %s244
    $region4: #{tpu_custom_call.1} parent=1 // loop_header_branch
      %29 = sbr.rel (%p27) target = $region8
    $region5: #{tpu_custom_call.1} parent=1 // loop_body
      %s31 = ssub.s32 %s26, 1
      %s32 = ssub.s32 %s26, 2
      %s33 = sadd.s32 %s26, 1
      %s34 = ssub.s32 %s26, %s33
      %p35 = scmp.eq.s32.totalorder %s34, 0
      %s37 = sadd.s32 %s36, 1
      %s38 = scalar_select %p35, %s36, %s37
      %p41 = pneg %p35
      %p42 = scmp.eq.s32.totalorder %s26, 1
      %p43 = por %p41, %p42
      %p44 = scmp.ne.s32.totalorder %s36, %s39
      %p45 = scmp.eq.s32.totalorder %s26, 0
      %p46 = por %p44, %p45
      %p47 = scmp.ne.s32.totalorder %s36, %s39
      %p48 = scmp.eq.s32.totalorder %s31, 1
      %p49 = por %p47, %p48
      %p50 = scmp.ne.s32.totalorder %s39, %s40
      %p51 = scmp.eq.s32.totalorder %s31, 0
      %p52 = por %p50, %p51
      %p53 = scmp.ne.s32.totalorder %s39, %s40
      %p54 = scmp.eq.s32.totalorder %s32, 1
      %p55 = por %p53, %p54
      %p57 = scmp.ne.s32.totalorder %s40, %s56
      %p58 = scmp.eq.s32.totalorder %s32, 0
      %p59 = por %p57, %p58
      %s60 = ssub.s32 %s26, %s33
      %p61 = scmp.eq.s32.totalorder %s60, 0
      %s63 = sadd.s32 %s62, 1
      %s64 = scalar_select %p61, %s62, %s63
      %p67 = pneg %p61
      %p68 = scmp.eq.s32.totalorder %s26, 1
      %p69 = por %p67, %p68
      %p70 = scmp.ne.s32.totalorder %s62, %s65
      %p71 = scmp.eq.s32.totalorder %s26, 0
      %p72 = por %p70, %p71
      %p73 = scmp.ne.s32.totalorder %s62, %s65
      %p74 = scmp.eq.s32.totalorder %s31, 1
      %p75 = por %p73, %p74
      %p76 = scmp.ne.s32.totalorder %s65, %s66
      %p77 = scmp.eq.s32.totalorder %s31, 0
      %p78 = por %p76, %p77
      %p79 = scmp.ne.s32.totalorder %s65, %s66
      %p80 = scmp.eq.s32.totalorder %s32, 1
      %p81 = por %p79, %p80
      %p83 = scmp.ne.s32.totalorder %s66, %s82
      %p84 = scmp.eq.s32.totalorder %s32, 0
      %p85 = por %p83, %p84
      %s86 = ssub.s32 %s26, %s33
      %p87 = scmp.eq.s32.totalorder %s86, 0
      %s89 = sadd.s32 %s88, 1
      %s90 = scalar_select %p87, %s88, %s89
      %p93 = pneg %p87
      %p94 = scmp.eq.s32.totalorder %s26, 1
      %p95 = por %p93, %p94
      %p96 = scmp.ne.s32.totalorder %s88, %s91
      %p97 = scmp.eq.s32.totalorder %s26, 0
      %p98 = por %p96, %p97
      %p99 = scmp.ne.s32.totalorder %s88, %s91
      %p100 = scmp.eq.s32.totalorder %s31, 1
      %p101 = por %p99, %p100
      %p102 = scmp.ne.s32.totalorder %s91, %s92
      %p103 = scmp.eq.s32.totalorder %s31, 0
      %p104 = por %p102, %p103
      %p105 = scmp.ne.s32.totalorder %s91, %s92
      %p106 = scmp.eq.s32.totalorder %s32, 1
      %p107 = por %p105, %p106
      %p109 = scmp.ne.s32.totalorder %s92, %s108
      %p110 = scmp.eq.s32.totalorder %s32, 0
      %p111 = por %p109, %p110
      %s113 = sadd.s32 %s112, 1
      %p116 = scmp.eq.s32.totalorder %s26, 1
      %p117 = scmp.ne.s32.totalorder %s112, %s114
      %p118 = scmp.eq.s32.totalorder %s26, 0
      %p119 = por %p117, %p118
      %p120 = scmp.ne.s32.totalorder %s112, %s114
      %p121 = scmp.eq.s32.totalorder %s31, 1
      %p122 = por %p120, %p121
      %p123 = scmp.ne.s32.totalorder %s114, %s115
      %p124 = scmp.eq.s32.totalorder %s31, 0
      %p125 = por %p123, %p124
      %p126 = scmp.ne.s32.totalorder %s114, %s115
      %p127 = scmp.eq.s32.totalorder %s32, 1
      %p128 = por %p126, %p127
      %p130 = scmp.ne.s32.totalorder %s115, %s129
      %p131 = scmp.eq.s32.totalorder %s32, 0
      %p132 = por %p130, %p131
      %s134 = sadd.s32 %s133, 1
      %p137 = scmp.eq.s32.totalorder %s26, 1
      %p138 = scmp.ne.s32.totalorder %s133, %s135
      %p139 = scmp.eq.s32.totalorder %s26, 0
      %p140 = por %p138, %p139
      %p141 = scmp.ne.s32.totalorder %s133, %s135
      %p142 = scmp.eq.s32.totalorder %s31, 1
      %p143 = por %p141, %p142
      %p144 = scmp.ne.s32.totalorder %s135, %s136
      %p145 = scmp.eq.s32.totalorder %s31, 0
      %p146 = por %p144, %p145
      %p147 = scmp.ne.s32.totalorder %s135, %s136
      %p148 = scmp.eq.s32.totalorder %s32, 1
      %p149 = por %p147, %p148
      %p151 = scmp.ne.s32.totalorder %s136, %s150
      %p152 = scmp.eq.s32.totalorder %s32, 0
      %p153 = por %p151, %p152
      %s155 = sadd.s32 %s154, 1
      %p158 = scmp.eq.s32.totalorder %s26, 1
      %p159 = scmp.ne.s32.totalorder %s154, %s156
      %p160 = scmp.eq.s32.totalorder %s26, 0
      %p161 = por %p159, %p160
      %p162 = scmp.ne.s32.totalorder %s154, %s156
      %p163 = scmp.eq.s32.totalorder %s31, 1
      %p164 = por %p162, %p163
      %p165 = scmp.ne.s32.totalorder %s156, %s157
      %p166 = scmp.eq.s32.totalorder %s31, 0
      %p167 = por %p165, %p166
      %p168 = scmp.ne.s32.totalorder %s156, %s157
      %p169 = scmp.eq.s32.totalorder %s32, 1
      %p170 = por %p168, %p169
      %p172 = scmp.ne.s32.totalorder %s157, %s171
      %p173 = scmp.eq.s32.totalorder %s32, 0
      %p174 = por %p172, %p173
      %s176 = sadd.s32 %s175, 1
      %p179 = scmp.eq.s32.totalorder %s26, 1
      %p180 = scmp.ne.s32.totalorder %s175, %s177
      %p181 = scmp.eq.s32.totalorder %s26, 0
      %p182 = por %p180, %p181
      %p183 = scmp.ne.s32.totalorder %s175, %s177
      %p184 = scmp.eq.s32.totalorder %s31, 1
      %p185 = por %p183, %p184
      %p186 = scmp.ne.s32.totalorder %s177, %s178
      %p187 = scmp.eq.s32.totalorder %s31, 0
      %p188 = por %p186, %p187
      %p189 = scmp.ne.s32.totalorder %s177, %s178
      %p190 = scmp.eq.s32.totalorder %s32, 1
      %p191 = por %p189, %p190
      %p193 = scmp.ne.s32.totalorder %s178, %s192
      %p194 = scmp.eq.s32.totalorder %s32, 0
      %p195 = por %p193, %p194
      %s197 = sadd.s32 %s196, 1
      %p200 = scmp.eq.s32.totalorder %s26, 1
      %p201 = scmp.ne.s32.totalorder %s196, %s198
      %p202 = scmp.eq.s32.totalorder %s26, 0
      %p203 = por %p201, %p202
      %p204 = scmp.ne.s32.totalorder %s196, %s198
      %p205 = scmp.eq.s32.totalorder %s31, 1
      %p206 = por %p204, %p205
      %p207 = scmp.ne.s32.totalorder %s198, %s199
      %p208 = scmp.eq.s32.totalorder %s31, 0
      %p209 = por %p207, %p208
      %p210 = scmp.ne.s32.totalorder %s198, %s199
      %p211 = scmp.eq.s32.totalorder %s32, 1
      %p212 = por %p210, %p211
      %p214 = scmp.ne.s32.totalorder %s199, %s213
      %p215 = scmp.eq.s32.totalorder %s32, 0
      %p216 = por %p214, %p215
      %s218 = sadd.s32 %s217, 1
      %p221 = scmp.eq.s32.totalorder %s26, 1
      %p222 = scmp.ne.s32.totalorder %s217, %s219
      %p223 = scmp.eq.s32.totalorder %s26, 0
      %p224 = por %p222, %p223
      %p225 = scmp.ne.s32.totalorder %s217, %s219
      %p226 = scmp.eq.s32.totalorder %s31, 1
      %p227 = por %p225, %p226
      %p228 = scmp.ne.s32.totalorder %s219, %s220
      %p229 = scmp.eq.s32.totalorder %s31, 0
      %p230 = por %p228, %p229
      %p231 = scmp.ne.s32.totalorder %s219, %s220
      %p232 = scmp.eq.s32.totalorder %s32, 1
      %p233 = por %p231, %p232
      %p235 = scmp.ne.s32.totalorder %s220, %s234
      %p236 = scmp.eq.s32.totalorder %s32, 0
      %p237 = por %p235, %p236
      %s238 = ssub.s32 %s26, %s33
      %p239 = scmp.eq.s32.totalorder %s238, 0
      %s241 = sadd.s32 %s240, 1
      %s242 = scalar_select %p239, %s240, %s241
      %p245 = pneg %p239
      %p246 = scmp.eq.s32.totalorder %s26, 1
      %p247 = por %p245, %p246
      %p248 = scmp.ne.s32.totalorder %s240, %s243
      %p249 = scmp.eq.s32.totalorder %s26, 0
      %p250 = por %p248, %p249
      %p251 = scmp.ne.s32.totalorder %s240, %s243
      %p252 = scmp.eq.s32.totalorder %s31, 1
      %p253 = por %p251, %p252
      %p254 = scmp.ne.s32.totalorder %s243, %s244
      %p255 = scmp.eq.s32.totalorder %s31, 0
      %p256 = por %p254, %p255
      %p257 = scmp.ne.s32.totalorder %s243, %s244
      %p258 = scmp.eq.s32.totalorder %s32, 1
      %p259 = por %p257, %p258
      %p261 = scmp.ne.s32.totalorder %s244, %s260
      %p262 = scmp.eq.s32.totalorder %s32, 0
      %p263 = por %p261, %p262
      %p264 = scmp.le.s32.totalorder 1, %s26
      %p265 = scmp.lt.s32.totalorder %s26, 3
      %p266 = pnand %p264, %p265
      %p267 = pneg %p266
      // Predicated region
      $region9: #{tpu_custom_call.1} parent=5 // pred_check
        _
      $region10: #{tpu_custom_call.1} parent=5 // pred_check_branch
        %269 = sbr.rel (%p266) target = $region12
      $region11: #{tpu_custom_call.1} parent=5 // pred_region
        %s270 = ssub.s32 %s26, 1
        // Predicated region
        $region13: #{tpu_custom_call.1} parent=11 // pred_check
          %p271 = pneg %p125
        $region14: #{tpu_custom_call.1} parent=11 // pred_check_branch
          %273 = sbr.rel (%p271) target = $region16
        $region15: #{tpu_custom_call.1} parent=11 // pred_region
          %s275 = ssub.s32 1024, 1024
          %276 = vsyncadd [#allocation9], %s275
          %s277 = sshll.u32 [#allocation8], 4
          %s278 = int_to_ptr.vmem [resolvable:$true] %s277
          %283 = dma.hbm_to_vmem [thread:$0]  %s3, 1024, %s278, [#allocation9], 64, 64, 4
        $region16: #{tpu_custom_call.1} parent=11 // pred_fallthru
          _
        // Predicated region
        $region17: #{tpu_custom_call.1} parent=11 // pred_check
          %p284 = pneg %p146
        $region18: #{tpu_custom_call.1} parent=11 // pred_check_branch
          %286 = sbr.rel (%p284) target = $region20
        $region19: #{tpu_custom_call.1} parent=11 // pred_region
          _
        $region20: #{tpu_custom_call.1} parent=11 // pred_fallthru
          _
        // Predicated region
        $region21: #{tpu_custom_call.1} parent=11 // pred_check
          %p287 = pneg %p167
        $region22: #{tpu_custom_call.1} parent=11 // pred_check_branch
          %289 = sbr.rel (%p287) target = $region24
        $region23: #{tpu_custom_call.1} parent=11 // pred_region
          %s291 = ssub.s32 1024, 1024
          %292 = vsyncadd [#allocation9], %s291
          %s293 = sshll.u32 [#allocation10], 4
          %s294 = int_to_ptr.vmem [resolvable:$true] %s293
          %299 = dma.hbm_to_vmem [thread:$0]  %s5, 1024, %s294, [#allocation9], 64, 64, 4
        $region24: #{tpu_custom_call.1} parent=11 // pred_fallthru
          _
        // Predicated region
        $region25: #{tpu_custom_call.1} parent=11 // pred_check
          %p300 = pneg %p188
        $region26: #{tpu_custom_call.1} parent=11 // pred_check_branch
          %302 = sbr.rel (%p300) target = $region28
        $region27: #{tpu_custom_call.1} parent=11 // pred_region
          _
        $region28: #{tpu_custom_call.1} parent=11 // pred_fallthru
          _
        // Predicated region
        $region29: #{tpu_custom_call.1} parent=11 // pred_check
          %p303 = pneg %p209
        $region30: #{tpu_custom_call.1} parent=11 // pred_check_branch
          %305 = sbr.rel (%p303) target = $region32
        $region31: #{tpu_custom_call.1} parent=11 // pred_region
          %s307 = ssub.s32 1024, 1024
          %308 = vsyncadd [#allocation12], %s307
          %s309 = sshll.u32 [#allocation11], 4
          %s310 = int_to_ptr.vmem [resolvable:$true] %s309
          %315 = dma.hbm_to_vmem [thread:$0]  %s7, 1024, %s310, [#allocation12], 64, 64, 4
        $region32: #{tpu_custom_call.1} parent=11 // pred_fallthru
          _
        // Predicated region
        $region33: #{tpu_custom_call.1} parent=11 // pred_check
          %p316 = pneg %p230
        $region34: #{tpu_custom_call.1} parent=11 // pred_check_branch
          %318 = sbr.rel (%p316) target = $region36
        $region35: #{tpu_custom_call.1} parent=11 // pred_region
          _
        $region36: #{tpu_custom_call.1} parent=11 // pred_fallthru
          _
      $region12: #{tpu_custom_call.1} parent=5 // pred_fallthru
        _
      %p319 = scmp.lt.s32.totalorder %s26, 2
      // Predicated region
      $region37: #{tpu_custom_call.1} parent=5 // pred_check
        %p320 = pneg %p319
      $region38: #{tpu_custom_call.1} parent=5 // pred_check_branch
        %322 = sbr.rel (%p320) target = $region40
      $region39: #{tpu_custom_call.1} parent=5 // pred_region
        // Predicated region
        $region41: #{tpu_custom_call.1} parent=39 // pred_check
          %p323 = pneg %p46
        $region42: #{tpu_custom_call.1} parent=39 // pred_check_branch
          %325 = sbr.rel (%p323) target = $region44
        $region43: #{tpu_custom_call.1} parent=39 // pred_region
          %s326 = sand.u32 %s36, 1
          %s327 = scalar_lea.sflag [#allocation3], %s326
          %s328 = sand.u32 %s36, 1
          %s329 = smul.addr %s328, 64
          %s330 = scalar_lea.vmem [#allocation2], %s329
          %s332 = ssub.s32 1024, 1024
          %333 = vsyncadd %s327, %s332
          %s334 = smul.addr %s26, 16
          %s335 = smul.addr %s334, 64
          %s336 = scalar_lea.hbm %s0, %s335
          %s337 = sshll.u32 %s330, 4
          %s338 = int_to_ptr.vmem [resolvable:$true] %s337
          %343 = dma.hbm_to_vmem [thread:$0]  %s336, 1024, %s338, %s327, 64, 64, 4
        $region44: #{tpu_custom_call.1} parent=39 // pred_fallthru
          _
        // Predicated region
        $region45: #{tpu_custom_call.1} parent=39 // pred_check
          %p344 = pneg %p72
        $region46: #{tpu_custom_call.1} parent=39 // pred_check_branch
          %346 = sbr.rel (%p344) target = $region48
        $region47: #{tpu_custom_call.1} parent=39 // pred_region
          %s347 = sand.u32 %s26, 1
          %s348 = scalar_lea.sflag [#allocation6], %s347
          %s349 = sand.u32 %s62, 1
          %s350 = smul.addr %s349, 64
          %s351 = scalar_lea.vmem [#allocation5], %s350
          %s353 = ssub.s32 1024, 1024
          %354 = vsyncadd %s348, %s353
          %s355 = smul.addr %s26, 16
          %s356 = smul.addr %s355, 64
          %s357 = scalar_lea.hbm %s1, %s356
          %s358 = sshll.u32 %s351, 4
          %s359 = int_to_ptr.vmem [resolvable:$true] %s358
          %364 = dma.hbm_to_vmem [thread:$0]  %s357, 1024, %s359, %s348, 64, 64, 4
        $region48: #{tpu_custom_call.1} parent=39 // pred_fallthru
          _
        // Predicated region
        $region49: #{tpu_custom_call.1} parent=39 // pred_check
          %p365 = pneg %p98
        $region50: #{tpu_custom_call.1} parent=39 // pred_check_branch
          %367 = sbr.rel (%p365) target = $region52
        $region51: #{tpu_custom_call.1} parent=39 // pred_region
          %s368 = sand.u32 %s26, 1
          %s369 = scalar_lea.sflag [#allocation6], %s368
          %s370 = sand.u32 %s88, 1
          %s371 = smul.addr %s370, 4
          %s372 = scalar_lea.vmem [#allocation7], %s371
          %s374 = ssub.s32 64, 64
          %375 = vsyncadd %s369, %s374
          %s376 = smul.addr %s26, 64
          %s377 = scalar_lea.hbm %s2, %s376
          %s379 = sshll.u32 %s372, 4
          %s380 = int_to_ptr.vmem [resolvable:$true] %s379
          %382 = dma.hbm_to_vmem [thread:$0]  %s377, 64, %s380, %s369
        $region52: #{tpu_custom_call.1} parent=39 // pred_fallthru
          _
      $region40: #{tpu_custom_call.1} parent=5 // pred_fallthru
        _
      %p383 = scmp.le.s32.totalorder 1, %s26
      %p384 = scmp.lt.s32.totalorder %s26, 3
      %p385 = pnand %p383, %p384
      %p386 = pneg %p385
      // Predicated region
      $region53: #{tpu_custom_call.1} parent=5 // pred_check
        _
      $region54: #{tpu_custom_call.1} parent=5 // pred_check_branch
        %388 = sbr.rel (%p385) target = $region56
      $region55: #{tpu_custom_call.1} parent=5 // pred_region
        %s389 = ssub.s32 %s26, 1
        %s390 = sand.u32 %s39, 1
        %s391 = scalar_lea.sflag [#allocation3], %s390
        %s392 = sand.u32 %s39, 1
        %s393 = smul.addr %s392, 64
        %s394 = scalar_lea.vmem [#allocation2], %s393
        // Predicated region
        $region57: #{tpu_custom_call.1} parent=55 // pred_check
          %p395 = pneg %p52
        $region58: #{tpu_custom_call.1} parent=55 // pred_check_branch
          %397 = sbr.rel (%p395) target = $region60
        $region59: #{tpu_custom_call.1} parent=55 // pred_region
          %398 = dma.done %s391, 1024
        $region60: #{tpu_custom_call.1} parent=55 // pred_fallthru
          _
        %s399 = sand.u32 %s31, 1
        %s400 = scalar_lea.sflag [#allocation6], %s399
        %s401 = sand.u32 %s65, 1
        %s402 = smul.addr %s401, 64
        %s403 = scalar_lea.vmem [#allocation5], %s402
        // Predicated region
        $region61: #{tpu_custom_call.1} parent=55 // pred_check
          %p404 = pneg %p78
        $region62: #{tpu_custom_call.1} parent=55 // pred_check_branch
          %406 = sbr.rel (%p404) target = $region64
        $region63: #{tpu_custom_call.1} parent=55 // pred_region
          %407 = dma.done %s400, 1024
        $region64: #{tpu_custom_call.1} parent=55 // pred_fallthru
          _
        %s408 = sand.u32 %s31, 1
        %s409 = scalar_lea.sflag [#allocation6], %s408
        %s410 = sand.u32 %s91, 1
        %s411 = smul.addr %s410, 4
        %s412 = scalar_lea.vmem [#allocation7], %s411
        // Predicated region
        $region65: #{tpu_custom_call.1} parent=55 // pred_check
          %p413 = pneg %p104
        $region66: #{tpu_custom_call.1} parent=55 // pred_check_branch
          %415 = sbr.rel (%p413) target = $region68
        $region67: #{tpu_custom_call.1} parent=55 // pred_region
          %416 = dma.done %s409, 64
        $region68: #{tpu_custom_call.1} parent=55 // pred_fallthru
          _
        // Predicated region
        $region69: #{tpu_custom_call.1} parent=55 // pred_check
          %p417 = pneg %p125
        $region70: #{tpu_custom_call.1} parent=55 // pred_check_branch
          %419 = sbr.rel (%p417) target = $region72
        $region71: #{tpu_custom_call.1} parent=55 // pred_region
          %420 = dma.done [#allocation9], 1024
        $region72: #{tpu_custom_call.1} parent=55 // pred_fallthru
          _
        // Predicated region
        $region73: #{tpu_custom_call.1} parent=55 // pred_check
          %p421 = pneg %p167
        $region74: #{tpu_custom_call.1} parent=55 // pred_check_branch
          %423 = sbr.rel (%p421) target = $region76
        $region75: #{tpu_custom_call.1} parent=55 // pred_region
          %424 = dma.done [#allocation9], 1024
        $region76: #{tpu_custom_call.1} parent=55 // pred_fallthru
          _
        // Predicated region
        $region77: #{tpu_custom_call.1} parent=55 // pred_check
          %p425 = pneg %p209
        $region78: #{tpu_custom_call.1} parent=55 // pred_check_branch
          %427 = sbr.rel (%p425) target = $region80
        $region79: #{tpu_custom_call.1} parent=55 // pred_region
          %428 = dma.done [#allocation12], 1024
        $region80: #{tpu_custom_call.1} parent=55 // pred_fallthru
          _
        %s429 = sand.u32 %s39, 1
        %s430 = scalar_lea.sflag [#allocation3], %s429
        %s431 = sand.u32 %s39, 1
        %s432 = smul.addr %s431, 64
        %s433 = scalar_lea.vmem [#allocation2], %s432
        %p434 = pneg %p52
        %p435 = pneg %p49
        %s436 = sand.u32 %s31, 1
        %s437 = scalar_lea.sflag [#allocation6], %s436
        %s438 = sand.u32 %s65, 1
        %s439 = smul.addr %s438, 64
        %s440 = scalar_lea.vmem [#allocation5], %s439
        %p441 = pneg %p78
        %p442 = pneg %p75
        %s443 = sand.u32 %s31, 1
        %s444 = scalar_lea.sflag [#allocation6], %s443
        %s445 = sand.u32 %s91, 1
        %s446 = smul.addr %s445, 4
        %s447 = scalar_lea.vmem [#allocation7], %s446
        %p448 = pneg %p104
        %p449 = pneg %p101
        %p450 = pneg %p125
        %p451 = pneg %p122
        %p452 = pneg %p146
        %p453 = pneg %p143
        %p454 = pneg %p167
        %p455 = pneg %p164
        %p456 = pneg %p188
        %p457 = pneg %p185
        %p458 = pneg %p209
        %p459 = pneg %p206
        %p460 = pneg %p230
        %p461 = pneg %p227
        %p462 = pneg %p256
        %p463 = pneg %p253
        %s464 = sand.u32 %s243, 1
        %s465 = scalar_lea.sflag [#allocation4], %s464
        %s466 = sand.u32 %s243, 1
        %s467 = smul.addr %s466, 8
        %s468 = scalar_lea.vmem [#allocation13], %s467
        %v470 = vld [vmem:[%s394] sm:$0xf]
        %v471 = vld [vmem:[%s394 + $0x4] sm:$0xf]
        %v472 = vld [vmem:[%s394 + $0x8] sm:$0xf]
        %v473 = vld [vmem:[%s394 + $0xc] sm:$0xf]
        %v474 = vld [vmem:[%s394 + $0x10] sm:$0xf]
        %v475 = vld [vmem:[%s394 + $0x14] sm:$0xf]
        %v476 = vld [vmem:[%s394 + $0x18] sm:$0xf]
        %v477 = vld [vmem:[%s394 + $0x1c] sm:$0xf]
        %v478 = vld [vmem:[%s394 + $0x20] sm:$0xf]
        %v479 = vld [vmem:[%s394 + $0x24] sm:$0xf]
        %v480 = vld [vmem:[%s394 + $0x28] sm:$0xf]
        %v481 = vld [vmem:[%s394 + $0x2c] sm:$0xf]
        %v482 = vld [vmem:[%s394 + $0x30] sm:$0xf]
        %v483 = vld [vmem:[%s394 + $0x34] sm:$0xf]
        %v484 = vld [vmem:[%s394 + $0x38] sm:$0xf]
        %v485 = vld [vmem:[%s394 + $0x3c] sm:$0xf]
        %v486 = vld [vmem:[%s403] sm:$0xf]
        %v487 = vld [vmem:[%s403 + $0x4] sm:$0xf]
        %v488 = vld [vmem:[%s403 + $0x8] sm:$0xf]
        %v489 = vld [vmem:[%s403 + $0xc] sm:$0xf]
        %v490 = vld [vmem:[%s403 + $0x10] sm:$0xf]
        %v491 = vld [vmem:[%s403 + $0x14] sm:$0xf]
        %v492 = vld [vmem:[%s403 + $0x18] sm:$0xf]
        %v493 = vld [vmem:[%s403 + $0x1c] sm:$0xf]
        %v494 = vld [vmem:[%s403 + $0x20] sm:$0xf]
        %v495 = vld [vmem:[%s403 + $0x24] sm:$0xf]
        %v496 = vld [vmem:[%s403 + $0x28] sm:$0xf]
        %v497 = vld [vmem:[%s403 + $0x2c] sm:$0xf]
        %v498 = vld [vmem:[%s403 + $0x30] sm:$0xf]
        %v499 = vld [vmem:[%s403 + $0x34] sm:$0xf]
        %v500 = vld [vmem:[%s403 + $0x38] sm:$0xf]
        %v501 = vld [vmem:[%s403 + $0x3c] sm:$0xf]
        %v502 = vld [vmem:[#allocation8] sm:$0xf]
        %v503 = vld [vmem:[#allocation8 + $0x4] sm:$0xf]
        %v504 = vld [vmem:[#allocation8 + $0x8] sm:$0xf]
        %v505 = vld [vmem:[#allocation8 + $0xc] sm:$0xf]
        %v506 = vld [vmem:[#allocation8 + $0x10] sm:$0xf]
        %v507 = vld [vmem:[#allocation8 + $0x14] sm:$0xf]
        %v508 = vld [vmem:[#allocation8 + $0x18] sm:$0xf]
        %v509 = vld [vmem:[#allocation8 + $0x1c] sm:$0xf]
        %v510 = vld [vmem:[#allocation8 + $0x20] sm:$0xf]
        %v511 = vld [vmem:[#allocation8 + $0x24] sm:$0xf]
        %v512 = vld [vmem:[#allocation8 + $0x28] sm:$0xf]
        %v513 = vld [vmem:[#allocation8 + $0x2c] sm:$0xf]
        %v514 = vld [vmem:[#allocation8 + $0x30] sm:$0xf]
        %v515 = vld [vmem:[#allocation8 + $0x34] sm:$0xf]
        %v516 = vld [vmem:[#allocation8 + $0x38] sm:$0xf]
        %v517 = vld [vmem:[#allocation8 + $0x3c] sm:$0xf]
        %v518 = vld [vmem:[%s4] sm:$0x1]
        %v535 = vunpack.c.l.b16 %v486
        %v536 = vunpack.c.l.b16 %v487
        %v537 = vunpack.c.l.b16 %v488
        %v538 = vunpack.c.l.b16 %v489
        %v539 = vunpack.c.l.b16 %v490
        %v540 = vunpack.c.l.b16 %v491
        %v541 = vunpack.c.l.b16 %v492
        %v542 = vunpack.c.l.b16 %v493
        %v543 = vunpack.c.l.b16 %v494
        %v544 = vunpack.c.l.b16 %v495
        %v545 = vunpack.c.l.b16 %v496
        %v546 = vunpack.c.l.b16 %v497
        %v547 = vunpack.c.l.b16 %v498
        %v548 = vunpack.c.l.b16 %v499
        %v549 = vunpack.c.l.b16 %v500
        %v550 = vunpack.c.l.b16 %v501
        %v551 = vpack.c.b16 %v536, %v535
        %v552 = vpack.c.b16 %v538, %v537
        %v553 = vpack.c.b16 %v540, %v539
        %v554 = vpack.c.b16 %v542, %v541
        %v555 = vpack.c.b16 %v544, %v543
        %v556 = vpack.c.b16 %v546, %v545
        %v557 = vpack.c.b16 %v548, %v547
        %v558 = vpack.c.b16 %v550, %v549
        %v583 = vunpack.c.l.b16 %v502
        %v584 = vunpack.c.l.b16 %v503
        %v585 = vunpack.c.l.b16 %v504
        %v586 = vunpack.c.l.b16 %v505
        %v587 = vunpack.c.l.b16 %v506
        %v588 = vunpack.c.l.b16 %v507
        %v589 = vunpack.c.l.b16 %v508
        %v590 = vunpack.c.l.b16 %v509
        %v591 = vunpack.c.l.b16 %v510
        %v592 = vunpack.c.l.b16 %v511
        %v593 = vunpack.c.l.b16 %v512
        %v594 = vunpack.c.l.b16 %v513
        %v595 = vunpack.c.l.b16 %v514
        %v596 = vunpack.c.l.b16 %v515
        %v597 = vunpack.c.l.b16 %v516
        %v598 = vunpack.c.l.b16 %v517
        %v599 = vpack.c.b16 %v584, %v583
        %v600 = vpack.c.b16 %v586, %v585
        %v601 = vpack.c.b16 %v588, %v587
        %v602 = vpack.c.b16 %v590, %v589
        %v603 = vpack.c.b16 %v592, %v591
        %v604 = vpack.c.b16 %v594, %v593
        %v605 = vpack.c.b16 %v596, %v595
        %v606 = vpack.c.b16 %v598, %v597
        %615 = vmatprep.subr.bf16.mxu0 0
        %616 = vmatpush1.bf16.msra.mxu0 %v599
        %617 = vmatprep.subr.bf16.mxu0 0
        %618 = vmatpush1.bf16.msra.mxu0 %v600
        %619 = vmatprep.subr.bf16.mxu0 0
        %620 = vmatpush1.bf16.msra.mxu0 %v601
        %621 = vmatprep.subr.bf16.mxu0 0
        %622 = vmatpush1.bf16.msra.mxu0 %v602
        %623 = vmatprep.subr.bf16.mxu0 0
        %624 = vmatpush1.bf16.msra.mxu0 %v603
        %625 = vmatprep.subr.bf16.mxu0 0
        %626 = vmatpush1.bf16.msra.mxu0 %v604
        %627 = vmatprep.subr.bf16.mxu0 0
        %628 = vmatpush1.bf16.msra.mxu0 %v605
        %629 = vmatprep.subr.bf16.mxu0 0
        %630 = vmatpush1.bf16.msra.mxu0 %v606
        %631 = vmatprep.subr.bf16.mxu0 0
        %632 = vmatpush1.bf16.msra.mxu0 0
        %633 = vmatprep.subr.bf16.mxu0 0
        %634 = vmatpush1.bf16.msra.mxu0 0
        %635 = vmatprep.subr.bf16.mxu0 0
        %636 = vmatpush1.bf16.msra.mxu0 0
        %637 = vmatprep.subr.bf16.mxu0 0
        %638 = vmatpush1.bf16.msra.mxu0 0
        %639 = vmatprep.subr.bf16.mxu0 0
        %640 = vmatpush1.bf16.msra.mxu0 0
        %641 = vmatprep.subr.bf16.mxu0 0
        %642 = vmatpush1.bf16.msra.mxu0 0
        %643 = vmatprep.subr.bf16.mxu0 0
        %644 = vmatpush1.bf16.msra.mxu0 0
        %645 = vmatprep.subr.bf16.mxu0 0
        %646 = vmatpush1.bf16.msra.mxu0 0
        %647 = vmatprep.mubr.bf16.mxu0 0
        %648 = vmatmul.mubr.bf16.gmra.mrb[0].mxu0 %v551
        %v649 = vpop.f32.mrb[0].mxu0
        %v650 = vadd.f32 0.0, %v649
        %v651 = vpop.f32.mrb[0].mxu0
        %v652 = vpop.f32.mrb[0].mxu0
        %v653 = vadd.f32 0.0, %v652
        %v654 = vpop.f32.mrb[0].mxu0
        %655 = vmatprep.mubr.bf16.mxu0 0
        %656 = vmatmul.mubr.bf16.gmra.mrb[0].mxu0 %v552
        %v657 = vpop.f32.mrb[0].mxu0
        %v658 = vadd.f32 0.0, %v657
        %v659 = vpop.f32.mrb[0].mxu0
        %v660 = vpop.f32.mrb[0].mxu0
        %v661 = vadd.f32 0.0, %v660
        %v662 = vpop.f32.mrb[0].mxu0
        %663 = vmatprep.mubr.bf16.mxu0 0
        %664 = vmatmul.mubr.bf16.gmra.mrb[0].mxu0 %v553
        %v665 = vpop.f32.mrb[0].mxu0
        %v666 = vadd.f32 0.0, %v665
        %v667 = vpop.f32.mrb[0].mxu0
        %v668 = vpop.f32.mrb[0].mxu0
        %v669 = vadd.f32 0.0, %v668
        %v670 = vpop.f32.mrb[0].mxu0
        %671 = vmatprep.mubr.bf16.mxu0 0
        %672 = vmatmul.mubr.bf16.gmra.mrb[0].mxu0 %v554
        %v673 = vpop.f32.mrb[0].mxu0
        %v674 = vadd.f32 0.0, %v673
        %v675 = vpop.f32.mrb[0].mxu0
        %v676 = vpop.f32.mrb[0].mxu0
        %v677 = vadd.f32 0.0, %v676
        %v678 = vpop.f32.mrb[0].mxu0
        %679 = vmatprep.mubr.bf16.mxu0 0
        %680 = vmatmul.mubr.bf16.gmra.mrb[0].mxu0 %v555
        %v681 = vpop.f32.mrb[0].mxu0
        %v682 = vadd.f32 0.0, %v681
        %v683 = vpop.f32.mrb[0].mxu0
        %v684 = vpop.f32.mrb[0].mxu0
        %v685 = vadd.f32 0.0, %v684
        %v686 = vpop.f32.mrb[0].mxu0
        %687 = vmatprep.mubr.bf16.mxu0 0
        %688 = vmatmul.mubr.bf16.gmra.mrb[0].mxu0 %v556
        %v689 = vpop.f32.mrb[0].mxu0
        %v690 = vadd.f32 0.0, %v689
        %v691 = vpop.f32.mrb[0].mxu0
        %v692 = vpop.f32.mrb[0].mxu0
        %v693 = vadd.f32 0.0, %v692
        %v694 = vpop.f32.mrb[0].mxu0
        %695 = vmatprep.mubr.bf16.mxu0 0
        %696 = vmatmul.mubr.bf16.gmra.mrb[0].mxu0 %v557
        %v697 = vpop.f32.mrb[0].mxu0
        %v698 = vadd.f32 0.0, %v697
        %v699 = vpop.f32.mrb[0].mxu0
        %v700 = vpop.f32.mrb[0].mxu0
        %v701 = vadd.f32 0.0, %v700
        %v702 = vpop.f32.mrb[0].mxu0
        %703 = vmatprep.mubr.bf16.mxu0 0
        %704 = vmatmul.mubr.bf16.gmra.mrb[0].mxu0 %v558
        %v705 = vpop.f32.mrb[0].mxu0
        %v706 = vadd.f32 0.0, %v705
        %v707 = vpop.f32.mrb[0].mxu0
        %v708 = vpop.f32.mrb[0].mxu0
        %v709 = vadd.f32 0.0, %v708
        %v710 = vpop.f32.mrb[0].mxu0
        %711 = vdwg.mxu0
        %v712 = vpack.c.bf16 %v653, %v650
        %v713 = vpack.c.bf16 %v661, %v658
        %v714 = vpack.c.bf16 %v669, %v666
        %v715 = vpack.c.bf16 %v677, %v674
        %v716 = vpack.c.bf16 %v685, %v682
        %v717 = vpack.c.bf16 %v693, %v690
        %v718 = vpack.c.bf16 %v701, %v698
        %v719 = vpack.c.bf16 %v709, %v706
        %v721 = vlaneseq
        %v722 = vshrl.u32 %v721, 7
        %v723 = vsub.s32 0, %v722
        %v724 = vrot.slane %v518, %v723
        %v742 = vunpack.c.l.b16 %v470
        %v743 = vunpack.c.l.b16 %v471
        %v744 = vunpack.c.l.b16 %v472
        %v745 = vunpack.c.l.b16 %v473
        %v746 = vunpack.c.l.b16 %v474
        %v747 = vunpack.c.l.b16 %v475
        %v748 = vunpack.c.l.b16 %v476
        %v749 = vunpack.c.l.b16 %v477
        %v750 = vunpack.c.l.b16 %v478
        %v751 = vunpack.c.l.b16 %v479
        %v752 = vunpack.c.l.b16 %v480
        %v753 = vunpack.c.l.b16 %v481
        %v754 = vunpack.c.l.b16 %v482
        %v755 = vunpack.c.l.b16 %v483
        %v756 = vunpack.c.l.b16 %v484
        %v757 = vunpack.c.l.b16 %v485
        %v758 = vpack.c.b16 %v743, %v742
        %v759 = vpack.c.b16 %v745, %v744
        %v760 = vpack.c.b16 %v747, %v746
        %v761 = vpack.c.b16 %v749, %v748
        %v762 = vpack.c.b16 %v751, %v750
        %v763 = vpack.c.b16 %v753, %v752
        %v764 = vpack.c.b16 %v755, %v754
        %v765 = vpack.c.b16 %v757, %v756
        %774 = vmatprep.subr.bf16.mxu0 0
        %775 = vmatpush1.bf16.msra.mxu0 %v712
        %776 = vmatprep.subr.bf16.mxu0 0
        %777 = vmatpush1.bf16.msra.mxu0 %v713
        %778 = vmatprep.subr.bf16.mxu0 0
        %779 = vmatpush1.bf16.msra.mxu0 %v714
        %780 = vmatprep.subr.bf16.mxu0 0
        %781 = vmatpush1.bf16.msra.mxu0 %v715
        %782 = vmatprep.subr.bf16.mxu0 0
        %783 = vmatpush1.bf16.msra.mxu0 %v716
        %784 = vmatprep.subr.bf16.mxu0 0
        %785 = vmatpush1.bf16.msra.mxu0 %v717
        %786 = vmatprep.subr.bf16.mxu0 0
        %787 = vmatpush1.bf16.msra.mxu0 %v718
        %788 = vmatprep.subr.bf16.mxu0 0
        %789 = vmatpush1.bf16.msra.mxu0 %v719
        %790 = vmatprep.subr.bf16.mxu0 0
        %791 = vmatpush1.bf16.msra.mxu0 0
        %792 = vmatprep.subr.bf16.mxu0 0
        %793 = vmatpush1.bf16.msra.mxu0 0
        %794 = vmatprep.subr.bf16.mxu0 0
        %795 = vmatpush1.bf16.msra.mxu0 0
        %796 = vmatprep.subr.bf16.mxu0 0
        %797 = vmatpush1.bf16.msra.mxu0 0
        %798 = vmatprep.subr.bf16.mxu0 0
        %799 = vmatpush1.bf16.msra.mxu0 0
        %800 = vmatprep.subr.bf16.mxu0 0
        %801 = vmatpush1.bf16.msra.mxu0 0
        %802 = vmatprep.subr.bf16.mxu0 0
        %803 = vmatpush1.bf16.msra.mxu0 0
        %804 = vmatprep.subr.bf16.mxu0 0
        %805 = vmatpush1.bf16.msra.mxu0 0
        %806 = vmatprep.mubr.bf16.mxu0 0
        %807 = vmatmul.mubr.bf16.gmra.mrb[0].mxu0 %v758
        %v808 = vpop.f32.mrb[0].mxu0
        %v809 = vadd.f32 %v724, %v808
        %v810 = vpop.f32.mrb[0].mxu0
        %v811 = vpop.f32.mrb[0].mxu0
        %v812 = vadd.f32 %v724, %v811
        %v813 = vpop.f32.mrb[0].mxu0
        %814 = vmatprep.mubr.bf16.mxu0 0
        %815 = vmatmul.mubr.bf16.gmra.mrb[0].mxu0 %v759
        %v816 = vpop.f32.mrb[0].mxu0
        %v817 = vadd.f32 %v724, %v816
        %v818 = vpop.f32.mrb[0].mxu0
        %v819 = vpop.f32.mrb[0].mxu0
        %v820 = vadd.f32 %v724, %v819
        %v821 = vpop.f32.mrb[0].mxu0
        %822 = vmatprep.mubr.bf16.mxu0 0
        %823 = vmatmul.mubr.bf16.gmra.mrb[0].mxu0 %v760
        %v824 = vpop.f32.mrb[0].mxu0
        %v825 = vadd.f32 %v724, %v824
        %v826 = vpop.f32.mrb[0].mxu0
        %v827 = vpop.f32.mrb[0].mxu0
        %v828 = vadd.f32 %v724, %v827
        %v829 = vpop.f32.mrb[0].mxu0
        %830 = vmatprep.mubr.bf16.mxu0 0
        %831 = vmatmul.mubr.bf16.gmra.mrb[0].mxu0 %v761
        %v832 = vpop.f32.mrb[0].mxu0
        %v833 = vadd.f32 %v724, %v832
        %v834 = vpop.f32.mrb[0].mxu0
        %v835 = vpop.f32.mrb[0].mxu0
        %v836 = vadd.f32 %v724, %v835
        %v837 = vpop.f32.mrb[0].mxu0
        %838 = vmatprep.mubr.bf16.mxu0 0
        %839 = vmatmul.mubr.bf16.gmra.mrb[0].mxu0 %v762
        %v840 = vpop.f32.mrb[0].mxu0
        %v841 = vadd.f32 %v724, %v840
        %v842 = vpop.f32.mrb[0].mxu0
        %v843 = vpop.f32.mrb[0].mxu0
        %v844 = vadd.f32 %v724, %v843
        %v845 = vpop.f32.mrb[0].mxu0
        %846 = vmatprep.mubr.bf16.mxu0 0
        %847 = vmatmul.mubr.bf16.gmra.mrb[0].mxu0 %v763
        %v848 = vpop.f32.mrb[0].mxu0
        %v849 = vadd.f32 %v724, %v848
        %v850 = vpop.f32.mrb[0].mxu0
        %v851 = vpop.f32.mrb[0].mxu0
        %v852 = vadd.f32 %v724, %v851
        %v853 = vpop.f32.mrb[0].mxu0
        %854 = vmatprep.mubr.bf16.mxu0 0
        %855 = vmatmul.mubr.bf16.gmra.mrb[0].mxu0 %v764
        %v856 = vpop.f32.mrb[0].mxu0
        %v857 = vadd.f32 %v724, %v856
        %v858 = vpop.f32.mrb[0].mxu0
        %v859 = vpop.f32.mrb[0].mxu0
        %v860 = vadd.f32 %v724, %v859
        %v861 = vpop.f32.mrb[0].mxu0
        %862 = vmatprep.mubr.bf16.mxu0 0
        %863 = vmatmul.mubr.bf16.gmra.mrb[0].mxu0 %v765
        %v864 = vpop.f32.mrb[0].mxu0
        %v865 = vadd.f32 %v724, %v864
        %v866 = vpop.f32.mrb[0].mxu0
        %v867 = vpop.f32.mrb[0].mxu0
        %v868 = vadd.f32 %v724, %v867
        %v869 = vpop.f32.mrb[0].mxu0
        %870 = vdwg.mxu0
        %v871 = vmax.f32 %v809, 0.0
        %v872 = vmax.f32 %v812, 0.0
        %v873 = vmax.f32 %v817, 0.0
        %v874 = vmax.f32 %v820, 0.0
        %v875 = vmax.f32 %v825, 0.0
        %v876 = vmax.f32 %v828, 0.0
        %v877 = vmax.f32 %v833, 0.0
        %v878 = vmax.f32 %v836, 0.0
        %v879 = vmax.f32 %v841, 0.0
        %v880 = vmax.f32 %v844, 0.0
        %v881 = vmax.f32 %v849, 0.0
        %v882 = vmax.f32 %v852, 0.0
        %v883 = vmax.f32 %v857, 0.0
        %v884 = vmax.f32 %v860, 0.0
        %v885 = vmax.f32 %v865, 0.0
        %v886 = vmax.f32 %v868, 0.0
        %v887 = vpack.c.bf16 %v872, %v871
        %v888 = vpack.c.bf16 %v874, %v873
        %v889 = vpack.c.bf16 %v876, %v875
        %v890 = vpack.c.bf16 %v878, %v877
        %v891 = vpack.c.bf16 %v880, %v879
        %v892 = vpack.c.bf16 %v882, %v881
        %v893 = vpack.c.bf16 %v884, %v883
        %v894 = vpack.c.bf16 %v886, %v885
        %v895 = vld [vmem:[#allocation10] sm:$0xf]
        %v896 = vld [vmem:[#allocation10 + $0x4] sm:$0xf]
        %v897 = vld [vmem:[#allocation10 + $0x8] sm:$0xf]
        %v898 = vld [vmem:[#allocation10 + $0xc] sm:$0xf]
        %v899 = vld [vmem:[#allocation10 + $0x10] sm:$0xf]
        %v900 = vld [vmem:[#allocation10 + $0x14] sm:$0xf]
        %v901 = vld [vmem:[#allocation10 + $0x18] sm:$0xf]
        %v902 = vld [vmem:[#allocation10 + $0x1c] sm:$0xf]
        %v903 = vld [vmem:[#allocation10 + $0x20] sm:$0xf]
        %v904 = vld [vmem:[#allocation10 + $0x24] sm:$0xf]
        %v905 = vld [vmem:[#allocation10 + $0x28] sm:$0xf]
        %v906 = vld [vmem:[#allocation10 + $0x2c] sm:$0xf]
        %v907 = vld [vmem:[#allocation10 + $0x30] sm:$0xf]
        %v908 = vld [vmem:[#allocation10 + $0x34] sm:$0xf]
        %v909 = vld [vmem:[#allocation10 + $0x38] sm:$0xf]
        %v910 = vld [vmem:[#allocation10 + $0x3c] sm:$0xf]
        %v911 = vld [vmem:[%s6] sm:$0x1]
        %v928 = vunpack.c.l.b16 %v895
        %v929 = vunpack.c.l.b16 %v896
        %v930 = vunpack.c.l.b16 %v897
        %v931 = vunpack.c.l.b16 %v898
        %v932 = vunpack.c.l.b16 %v899
        %v933 = vunpack.c.l.b16 %v900
        %v934 = vunpack.c.l.b16 %v901
        %v935 = vunpack.c.l.b16 %v902
        %v936 = vunpack.c.l.b16 %v903
        %v937 = vunpack.c.l.b16 %v904
        %v938 = vunpack.c.l.b16 %v905
        %v939 = vunpack.c.l.b16 %v906
        %v940 = vunpack.c.l.b16 %v907
        %v941 = vunpack.c.l.b16 %v908
        %v942 = vunpack.c.l.b16 %v909
        %v943 = vunpack.c.l.b16 %v910
        %v944 = vpack.c.b16 %v929, %v928
        %v945 = vpack.c.b16 %v931, %v930
        %v946 = vpack.c.b16 %v933, %v932
        %v947 = vpack.c.b16 %v935, %v934
        %v948 = vpack.c.b16 %v937, %v936
        %v949 = vpack.c.b16 %v939, %v938
        %v950 = vpack.c.b16 %v941, %v940
        %v951 = vpack.c.b16 %v943, %v942
        %960 = vmatprep.subr.bf16.mxu0 0
        %961 = vmatpush1.bf16.msra.mxu0 %v944
        %962 = vmatprep.subr.bf16.mxu0 0
        %963 = vmatpush1.bf16.msra.mxu0 %v945
        %964 = vmatprep.subr.bf16.mxu0 0
        %965 = vmatpush1.bf16.msra.mxu0 %v946
        %966 = vmatprep.subr.bf16.mxu0 0
        %967 = vmatpush1.bf16.msra.mxu0 %v947
        %968 = vmatprep.subr.bf16.mxu0 0
        %969 = vmatpush1.bf16.msra.mxu0 %v948
        %970 = vmatprep.subr.bf16.mxu0 0
        %971 = vmatpush1.bf16.msra.mxu0 %v949
        %972 = vmatprep.subr.bf16.mxu0 0
        %973 = vmatpush1.bf16.msra.mxu0 %v950
        %974 = vmatprep.subr.bf16.mxu0 0
        %975 = vmatpush1.bf16.msra.mxu0 %v951
        %976 = vmatprep.subr.bf16.mxu0 0
        %977 = vmatpush1.bf16.msra.mxu0 0
        %978 = vmatprep.subr.bf16.mxu0 0
        %979 = vmatpush1.bf16.msra.mxu0 0
        %980 = vmatprep.subr.bf16.mxu0 0
        %981 = vmatpush1.bf16.msra.mxu0 0
        %982 = vmatprep.subr.bf16.mxu0 0
        %983 = vmatpush1.bf16.msra.mxu0 0
        %984 = vmatprep.subr.bf16.mxu0 0
        %985 = vmatpush1.bf16.msra.mxu0 0
        %986 = vmatprep.subr.bf16.mxu0 0
        %987 = vmatpush1.bf16.msra.mxu0 0
        %988 = vmatprep.subr.bf16.mxu0 0
        %989 = vmatpush1.bf16.msra.mxu0 0
        %990 = vmatprep.subr.bf16.mxu0 0
        %991 = vmatpush1.bf16.msra.mxu0 0
        %992 = vmatprep.mubr.bf16.mxu0 0
        %993 = vmatmul.mubr.bf16.gmra.mrb[0].mxu0 %v887
        %v994 = vpop.f32.mrb[0].mxu0
        %v995 = vadd.f32 0.0, %v994
        %v996 = vpop.f32.mrb[0].mxu0
        %v997 = vpop.f32.mrb[0].mxu0
        %v998 = vadd.f32 0.0, %v997
        %v999 = vpop.f32.mrb[0].mxu0
        %1000 = vmatprep.mubr.bf16.mxu0 0
        %1001 = vmatmul.mubr.bf16.gmra.mrb[0].mxu0 %v888
        %v1002 = vpop.f32.mrb[0].mxu0
        %v1003 = vadd.f32 0.0, %v1002
        %v1004 = vpop.f32.mrb[0].mxu0
        %v1005 = vpop.f32.mrb[0].mxu0
        %v1006 = vadd.f32 0.0, %v1005
        %v1007 = vpop.f32.mrb[0].mxu0
        %1008 = vmatprep.mubr.bf16.mxu0 0
        %1009 = vmatmul.mubr.bf16.gmra.mrb[0].mxu0 %v889
        %v1010 = vpop.f32.mrb[0].mxu0
        %v1011 = vadd.f32 0.0, %v1010
        %v1012 = vpop.f32.mrb[0].mxu0
        %v1013 = vpop.f32.mrb[0].mxu0
        %v1014 = vadd.f32 0.0, %v1013
        %v1015 = vpop.f32.mrb[0].mxu0
        %1016 = vmatprep.mubr.bf16.mxu0 0
        %1017 = vmatmul.mubr.bf16.gmra.mrb[0].mxu0 %v890
        %v1018 = vpop.f32.mrb[0].mxu0
        %v1019 = vadd.f32 0.0, %v1018
        %v1020 = vpop.f32.mrb[0].mxu0
        %v1021 = vpop.f32.mrb[0].mxu0
        %v1022 = vadd.f32 0.0, %v1021
        %v1023 = vpop.f32.mrb[0].mxu0
        %1024 = vmatprep.mubr.bf16.mxu0 0
        %1025 = vmatmul.mubr.bf16.gmra.mrb[0].mxu0 %v891
        %v1026 = vpop.f32.mrb[0].mxu0
        %v1027 = vadd.f32 0.0, %v1026
        %v1028 = vpop.f32.mrb[0].mxu0
        %v1029 = vpop.f32.mrb[0].mxu0
        %v1030 = vadd.f32 0.0, %v1029
        %v1031 = vpop.f32.mrb[0].mxu0
        %1032 = vmatprep.mubr.bf16.mxu0 0
        %1033 = vmatmul.mubr.bf16.gmra.mrb[0].mxu0 %v892
        %v1034 = vpop.f32.mrb[0].mxu0
        %v1035 = vadd.f32 0.0, %v1034
        %v1036 = vpop.f32.mrb[0].mxu0
        %v1037 = vpop.f32.mrb[0].mxu0
        %v1038 = vadd.f32 0.0, %v1037
        %v1039 = vpop.f32.mrb[0].mxu0
        %1040 = vmatprep.mubr.bf16.mxu0 0
        %1041 = vmatmul.mubr.bf16.gmra.mrb[0].mxu0 %v893
        %v1042 = vpop.f32.mrb[0].mxu0
        %v1043 = vadd.f32 0.0, %v1042
        %v1044 = vpop.f32.mrb[0].mxu0
        %v1045 = vpop.f32.mrb[0].mxu0
        %v1046 = vadd.f32 0.0, %v1045
        %v1047 = vpop.f32.mrb[0].mxu0
        %1048 = vmatprep.mubr.bf16.mxu0 0
        %1049 = vmatmul.mubr.bf16.gmra.mrb[0].mxu0 %v894
        %v1050 = vpop.f32.mrb[0].mxu0
        %v1051 = vadd.f32 0.0, %v1050
        %v1052 = vpop.f32.mrb[0].mxu0
        %v1053 = vpop.f32.mrb[0].mxu0
        %v1054 = vadd.f32 0.0, %v1053
        %v1055 = vpop.f32.mrb[0].mxu0
        %1056 = vdwg.mxu0
        %v1057 = vpack.c.bf16 %v998, %v995
        %v1058 = vpack.c.bf16 %v1006, %v1003
        %v1059 = vpack.c.bf16 %v1014, %v1011
        %v1060 = vpack.c.bf16 %v1022, %v1019
        %v1061 = vpack.c.bf16 %v1030, %v1027
        %v1062 = vpack.c.bf16 %v1038, %v1035
        %v1063 = vpack.c.bf16 %v1046, %v1043
        %v1064 = vpack.c.bf16 %v1054, %v1051
        %v1066 = vlaneseq
        %v1067 = vshrl.u32 %v1066, 7
        %v1068 = vsub.s32 0, %v1067
        %v1069 = vrot.slane %v911, %v1068
        %1071 = vmatprep.subr.bf16.mxu0 0
        %1072 = vmatpush1.bf16.msra.mxu0 %v1057
        %1073 = vmatprep.subr.bf16.mxu0 0
        %1074 = vmatpush1.bf16.msra.mxu0 %v1058
        %1075 = vmatprep.subr.bf16.mxu0 0
        %1076 = vmatpush1.bf16.msra.mxu0 %v1059
        %1077 = vmatprep.subr.bf16.mxu0 0
        %1078 = vmatpush1.bf16.msra.mxu0 %v1060
        %1079 = vmatprep.subr.bf16.mxu0 0
        %1080 = vmatpush1.bf16.msra.mxu0 %v1061
        %1081 = vmatprep.subr.bf16.mxu0 0
        %1082 = vmatpush1.bf16.msra.mxu0 %v1062
        %1083 = vmatprep.subr.bf16.mxu0 0
        %1084 = vmatpush1.bf16.msra.mxu0 %v1063
        %1085 = vmatprep.subr.bf16.mxu0 0
        %1086 = vmatpush1.bf16.msra.mxu0 %v1064
        %1087 = vmatprep.subr.bf16.mxu0 0
        %1088 = vmatpush1.bf16.msra.mxu0 0
        %1089 = vmatprep.subr.bf16.mxu0 0
        %1090 = vmatpush1.bf16.msra.mxu0 0
        %1091 = vmatprep.subr.bf16.mxu0 0
        %1092 = vmatpush1.bf16.msra.mxu0 0
        %1093 = vmatprep.subr.bf16.mxu0 0
        %1094 = vmatpush1.bf16.msra.mxu0 0
        %1095 = vmatprep.subr.bf16.mxu0 0
        %1096 = vmatpush1.bf16.msra.mxu0 0
        %1097 = vmatprep.subr.bf16.mxu0 0
        %1098 = vmatpush1.bf16.msra.mxu0 0
        %1099 = vmatprep.subr.bf16.mxu0 0
        %1100 = vmatpush1.bf16.msra.mxu0 0
        %1101 = vmatprep.subr.bf16.mxu0 0
        %1102 = vmatpush1.bf16.msra.mxu0 0
        %1103 = vmatprep.mubr.bf16.mxu0 0
        %1104 = vmatmul.mubr.bf16.gmra.mrb[0].mxu0 %v758
        %v1105 = vpop.f32.mrb[0].mxu0
        %v1106 = vadd.f32 %v1069, %v1105
        %v1107 = vpop.f32.mrb[0].mxu0
        %v1108 = vpop.f32.mrb[0].mxu0
        %v1109 = vadd.f32 %v1069, %v1108
        %v1110 = vpop.f32.mrb[0].mxu0
        %1111 = vmatprep.mubr.bf16.mxu0 0
        %1112 = vmatmul.mubr.bf16.gmra.mrb[0].mxu0 %v759
        %v1113 = vpop.f32.mrb[0].mxu0
        %v1114 = vadd.f32 %v1069, %v1113
        %v1115 = vpop.f32.mrb[0].mxu0
        %v1116 = vpop.f32.mrb[0].mxu0
        %v1117 = vadd.f32 %v1069, %v1116
        %v1118 = vpop.f32.mrb[0].mxu0
        %1119 = vmatprep.mubr.bf16.mxu0 0
        %1120 = vmatmul.mubr.bf16.gmra.mrb[0].mxu0 %v760
        %v1121 = vpop.f32.mrb[0].mxu0
        %v1122 = vadd.f32 %v1069, %v1121
        %v1123 = vpop.f32.mrb[0].mxu0
        %v1124 = vpop.f32.mrb[0].mxu0
        %v1125 = vadd.f32 %v1069, %v1124
        %v1126 = vpop.f32.mrb[0].mxu0
        %1127 = vmatprep.mubr.bf16.mxu0 0
        %1128 = vmatmul.mubr.bf16.gmra.mrb[0].mxu0 %v761
        %v1129 = vpop.f32.mrb[0].mxu0
        %v1130 = vadd.f32 %v1069, %v1129
        %v1131 = vpop.f32.mrb[0].mxu0
        %v1132 = vpop.f32.mrb[0].mxu0
        %v1133 = vadd.f32 %v1069, %v1132
        %v1134 = vpop.f32.mrb[0].mxu0
        %1135 = vmatprep.mubr.bf16.mxu0 0
        %1136 = vmatmul.mubr.bf16.gmra.mrb[0].mxu0 %v762
        %v1137 = vpop.f32.mrb[0].mxu0
        %v1138 = vadd.f32 %v1069, %v1137
        %v1139 = vpop.f32.mrb[0].mxu0
        %v1140 = vpop.f32.mrb[0].mxu0
        %v1141 = vadd.f32 %v1069, %v1140
        %v1142 = vpop.f32.mrb[0].mxu0
        %1143 = vmatprep.mubr.bf16.mxu0 0
        %1144 = vmatmul.mubr.bf16.gmra.mrb[0].mxu0 %v763
        %v1145 = vpop.f32.mrb[0].mxu0
        %v1146 = vadd.f32 %v1069, %v1145
        %v1147 = vpop.f32.mrb[0].mxu0
        %v1148 = vpop.f32.mrb[0].mxu0
        %v1149 = vadd.f32 %v1069, %v1148
        %v1150 = vpop.f32.mrb[0].mxu0
        %1151 = vmatprep.mubr.bf16.mxu0 0
        %1152 = vmatmul.mubr.bf16.gmra.mrb[0].mxu0 %v764
        %v1153 = vpop.f32.mrb[0].mxu0
        %v1154 = vadd.f32 %v1069, %v1153
        %v1155 = vpop.f32.mrb[0].mxu0
        %v1156 = vpop.f32.mrb[0].mxu0
        %v1157 = vadd.f32 %v1069, %v1156
        %v1158 = vpop.f32.mrb[0].mxu0
        %1159 = vmatprep.mubr.bf16.mxu0 0
        %1160 = vmatmul.mubr.bf16.gmra.mrb[0].mxu0 %v765
        %v1161 = vpop.f32.mrb[0].mxu0
        %v1162 = vadd.f32 %v1069, %v1161
        %v1163 = vpop.f32.mrb[0].mxu0
        %v1164 = vpop.f32.mrb[0].mxu0
        %v1165 = vadd.f32 %v1069, %v1164
        %v1166 = vpop.f32.mrb[0].mxu0
        %1167 = vdwg.mxu0
        %v1168 = vmax.f32 %v1106, 0.0
        %v1169 = vmax.f32 %v1109, 0.0
        %v1170 = vmax.f32 %v1114, 0.0
        %v1171 = vmax.f32 %v1117, 0.0
        %v1172 = vmax.f32 %v1122, 0.0
        %v1173 = vmax.f32 %v1125, 0.0
        %v1174 = vmax.f32 %v1130, 0.0
        %v1175 = vmax.f32 %v1133, 0.0
        %v1176 = vmax.f32 %v1138, 0.0
        %v1177 = vmax.f32 %v1141, 0.0
        %v1178 = vmax.f32 %v1146, 0.0
        %v1179 = vmax.f32 %v1149, 0.0
        %v1180 = vmax.f32 %v1154, 0.0
        %v1181 = vmax.f32 %v1157, 0.0
        %v1182 = vmax.f32 %v1162, 0.0
        %v1183 = vmax.f32 %v1165, 0.0
        %v1184 = vpack.c.bf16 %v1169, %v1168
        %v1185 = vpack.c.bf16 %v1171, %v1170
        %v1186 = vpack.c.bf16 %v1173, %v1172
        %v1187 = vpack.c.bf16 %v1175, %v1174
        %v1188 = vpack.c.bf16 %v1177, %v1176
        %v1189 = vpack.c.bf16 %v1179, %v1178
        %v1190 = vpack.c.bf16 %v1181, %v1180
        %v1191 = vpack.c.bf16 %v1183, %v1182
        %v1192 = vld [vmem:[#allocation11] sm:$0xf]
        %v1193 = vld [vmem:[#allocation11 + $0x4] sm:$0xf]
        %v1194 = vld [vmem:[#allocation11 + $0x8] sm:$0xf]
        %v1195 = vld [vmem:[#allocation11 + $0xc] sm:$0xf]
        %v1196 = vld [vmem:[#allocation11 + $0x10] sm:$0xf]
        %v1197 = vld [vmem:[#allocation11 + $0x14] sm:$0xf]
        %v1198 = vld [vmem:[#allocation11 + $0x18] sm:$0xf]
        %v1199 = vld [vmem:[#allocation11 + $0x1c] sm:$0xf]
        %v1200 = vld [vmem:[#allocation11 + $0x20] sm:$0xf]
        %v1201 = vld [vmem:[#allocation11 + $0x24] sm:$0xf]
        %v1202 = vld [vmem:[#allocation11 + $0x28] sm:$0xf]
        %v1203 = vld [vmem:[#allocation11 + $0x2c] sm:$0xf]
        %v1204 = vld [vmem:[#allocation11 + $0x30] sm:$0xf]
        %v1205 = vld [vmem:[#allocation11 + $0x34] sm:$0xf]
        %v1206 = vld [vmem:[#allocation11 + $0x38] sm:$0xf]
        %v1207 = vld [vmem:[#allocation11 + $0x3c] sm:$0xf]
        %v1208 = vld [vmem:[%s8] sm:$0x1]
        %v1225 = vunpack.c.l.b16 %v1192
        %v1226 = vunpack.c.l.b16 %v1193
        %v1227 = vunpack.c.l.b16 %v1194
        %v1228 = vunpack.c.l.b16 %v1195
        %v1229 = vunpack.c.l.b16 %v1196
        %v1230 = vunpack.c.l.b16 %v1197
        %v1231 = vunpack.c.l.b16 %v1198
        %v1232 = vunpack.c.l.b16 %v1199
        %v1233 = vunpack.c.l.b16 %v1200
        %v1234 = vunpack.c.l.b16 %v1201
        %v1235 = vunpack.c.l.b16 %v1202
        %v1236 = vunpack.c.l.b16 %v1203
        %v1237 = vunpack.c.l.b16 %v1204
        %v1238 = vunpack.c.l.b16 %v1205
        %v1239 = vunpack.c.l.b16 %v1206
        %v1240 = vunpack.c.l.b16 %v1207
        %v1241 = vpack.c.b16 %v1226, %v1225
        %v1242 = vpack.c.b16 %v1228, %v1227
        %v1243 = vpack.c.b16 %v1230, %v1229
        %v1244 = vpack.c.b16 %v1232, %v1231
        %v1245 = vpack.c.b16 %v1234, %v1233
        %v1246 = vpack.c.b16 %v1236, %v1235
        %v1247 = vpack.c.b16 %v1238, %v1237
        %v1248 = vpack.c.b16 %v1240, %v1239
        %1257 = vmatprep.subr.bf16.mxu0 0
        %1258 = vmatpush1.bf16.msra.mxu0 %v1241
        %1259 = vmatprep.subr.bf16.mxu0 0
        %1260 = vmatpush1.bf16.msra.mxu0 %v1242
        %1261 = vmatprep.subr.bf16.mxu0 0
        %1262 = vmatpush1.bf16.msra.mxu0 %v1243
        %1263 = vmatprep.subr.bf16.mxu0 0
        %1264 = vmatpush1.bf16.msra.mxu0 %v1244
        %1265 = vmatprep.subr.bf16.mxu0 0
        %1266 = vmatpush1.bf16.msra.mxu0 %v1245
        %1267 = vmatprep.subr.bf16.mxu0 0
        %1268 = vmatpush1.bf16.msra.mxu0 %v1246
        %1269 = vmatprep.subr.bf16.mxu0 0
        %1270 = vmatpush1.bf16.msra.mxu0 %v1247
        %1271 = vmatprep.subr.bf16.mxu0 0
        %1272 = vmatpush1.bf16.msra.mxu0 %v1248
        %1273 = vmatprep.subr.bf16.mxu0 0
        %1274 = vmatpush1.bf16.msra.mxu0 0
        %1275 = vmatprep.subr.bf16.mxu0 0
        %1276 = vmatpush1.bf16.msra.mxu0 0
        %1277 = vmatprep.subr.bf16.mxu0 0
        %1278 = vmatpush1.bf16.msra.mxu0 0
        %1279 = vmatprep.subr.bf16.mxu0 0
        %1280 = vmatpush1.bf16.msra.mxu0 0
        %1281 = vmatprep.subr.bf16.mxu0 0
        %1282 = vmatpush1.bf16.msra.mxu0 0
        %1283 = vmatprep.subr.bf16.mxu0 0
        %1284 = vmatpush1.bf16.msra.mxu0 0
        %1285 = vmatprep.subr.bf16.mxu0 0
        %1286 = vmatpush1.bf16.msra.mxu0 0
        %1287 = vmatprep.subr.bf16.mxu0 0
        %1288 = vmatpush1.bf16.msra.mxu0 0
        %1289 = vmatprep.mubr.bf16.mxu0 0
        %1290 = vmatmul.mubr.bf16.gmra.mrb[0].mxu0 %v1184
        %v1291 = vpop.f32.mrb[0].mxu0
        %v1292 = vadd.f32 0.0, %v1291
        %v1293 = vpop.f32.mrb[0].mxu0
        %v1294 = vpop.f32.mrb[0].mxu0
        %v1295 = vadd.f32 0.0, %v1294
        %v1296 = vpop.f32.mrb[0].mxu0
        %1297 = vmatprep.mubr.bf16.mxu0 0
        %1298 = vmatmul.mubr.bf16.gmra.mrb[0].mxu0 %v1185
        %v1299 = vpop.f32.mrb[0].mxu0
        %v1300 = vadd.f32 0.0, %v1299
        %v1301 = vpop.f32.mrb[0].mxu0
        %v1302 = vpop.f32.mrb[0].mxu0
        %v1303 = vadd.f32 0.0, %v1302
        %v1304 = vpop.f32.mrb[0].mxu0
        %1305 = vmatprep.mubr.bf16.mxu0 0
        %1306 = vmatmul.mubr.bf16.gmra.mrb[0].mxu0 %v1186
        %v1307 = vpop.f32.mrb[0].mxu0
        %v1308 = vadd.f32 0.0, %v1307
        %v1309 = vpop.f32.mrb[0].mxu0
        %v1310 = vpop.f32.mrb[0].mxu0
        %v1311 = vadd.f32 0.0, %v1310
        %v1312 = vpop.f32.mrb[0].mxu0
        %1313 = vmatprep.mubr.bf16.mxu0 0
        %1314 = vmatmul.mubr.bf16.gmra.mrb[0].mxu0 %v1187
        %v1315 = vpop.f32.mrb[0].mxu0
        %v1316 = vadd.f32 0.0, %v1315
        %v1317 = vpop.f32.mrb[0].mxu0
        %v1318 = vpop.f32.mrb[0].mxu0
        %v1319 = vadd.f32 0.0, %v1318
        %v1320 = vpop.f32.mrb[0].mxu0
        %1321 = vmatprep.mubr.bf16.mxu0 0
        %1322 = vmatmul.mubr.bf16.gmra.mrb[0].mxu0 %v1188
        %v1323 = vpop.f32.mrb[0].mxu0
        %v1324 = vadd.f32 0.0, %v1323
        %v1325 = vpop.f32.mrb[0].mxu0
        %v1326 = vpop.f32.mrb[0].mxu0
        %v1327 = vadd.f32 0.0, %v1326
        %v1328 = vpop.f32.mrb[0].mxu0
        %1329 = vmatprep.mubr.bf16.mxu0 0
        %1330 = vmatmul.mubr.bf16.gmra.mrb[0].mxu0 %v1189
        %v1331 = vpop.f32.mrb[0].mxu0
        %v1332 = vadd.f32 0.0, %v1331
        %v1333 = vpop.f32.mrb[0].mxu0
        %v1334 = vpop.f32.mrb[0].mxu0
        %v1335 = vadd.f32 0.0, %v1334
        %v1336 = vpop.f32.mrb[0].mxu0
        %1337 = vmatprep.mubr.bf16.mxu0 0
        %1338 = vmatmul.mubr.bf16.gmra.mrb[0].mxu0 %v1190
        %v1339 = vpop.f32.mrb[0].mxu0
        %v1340 = vadd.f32 0.0, %v1339
        %v1341 = vpop.f32.mrb[0].mxu0
        %v1342 = vpop.f32.mrb[0].mxu0
        %v1343 = vadd.f32 0.0, %v1342
        %v1344 = vpop.f32.mrb[0].mxu0
        %1345 = vmatprep.mubr.bf16.mxu0 0
        %1346 = vmatmul.mubr.bf16.gmra.mrb[0].mxu0 %v1191
        %v1347 = vpop.f32.mrb[0].mxu0
        %v1348 = vadd.f32 0.0, %v1347
        %v1349 = vpop.f32.mrb[0].mxu0
        %v1350 = vpop.f32.mrb[0].mxu0
        %v1351 = vadd.f32 0.0, %v1350
        %v1352 = vpop.f32.mrb[0].mxu0
        %1353 = vdwg.mxu0
        %v1354 = vpack.c.bf16 %v1295, %v1292
        %v1355 = vpack.c.bf16 %v1303, %v1300
        %v1356 = vpack.c.bf16 %v1311, %v1308
        %v1357 = vpack.c.bf16 %v1319, %v1316
        %v1358 = vpack.c.bf16 %v1327, %v1324
        %v1359 = vpack.c.bf16 %v1335, %v1332
        %v1360 = vpack.c.bf16 %v1343, %v1340
        %v1361 = vpack.c.bf16 %v1351, %v1348
        %1362 = vmatprep.subr.bf16.mxu0 0
        %1363 = vmatpush1.bf16.msra.mxu0 %v1354
        %1364 = vmatprep.subr.bf16.mxu0 0
        %1365 = vmatpush1.bf16.msra.mxu0 %v1355
        %1366 = vmatprep.subr.bf16.mxu0 0
        %1367 = vmatpush1.bf16.msra.mxu0 %v1356
        %1368 = vmatprep.subr.bf16.mxu0 0
        %1369 = vmatpush1.bf16.msra.mxu0 %v1357
        %1370 = vmatprep.subr.bf16.mxu0 0
        %1371 = vmatpush1.bf16.msra.mxu0 %v1358
        %1372 = vmatprep.subr.bf16.mxu0 0
        %1373 = vmatpush1.bf16.msra.mxu0 %v1359
        %1374 = vmatprep.subr.bf16.mxu0 0
        %1375 = vmatpush1.bf16.msra.mxu0 %v1360
        %1376 = vmatprep.subr.bf16.mxu0 0
        %1377 = vmatpush1.bf16.msra.mxu0 %v1361
        %1378 = vmatprep.subr.bf16.mxu0 0
        %1379 = vmatpush1.bf16.msra.mxu0 0
        %1380 = vmatprep.subr.bf16.mxu0 0
        %1381 = vmatpush1.bf16.msra.mxu0 0
        %1382 = vmatprep.subr.bf16.mxu0 0
        %1383 = vmatpush1.bf16.msra.mxu0 0
        %1384 = vmatprep.subr.bf16.mxu0 0
        %1385 = vmatpush1.bf16.msra.mxu0 0
        %1386 = vmatprep.subr.bf16.mxu0 0
        %1387 = vmatpush1.bf16.msra.mxu0 0
        %1388 = vmatprep.subr.bf16.mxu0 0
        %1389 = vmatpush1.bf16.msra.mxu0 0
        %1390 = vmatprep.subr.bf16.mxu0 0
        %1391 = vmatpush1.bf16.msra.mxu0 0
        %1392 = vmatprep.subr.bf16.mxu0 0
        %1393 = vmatpush1.bf16.msra.mxu0 0
        %1394 = vmatprep.mubr.bf16.mxu0 0
        %1395 = vmatmul.mubr.bf16.gmra.mrb[0].mxu0 %v758
        %v1396 = vpop.f32.mrb[0].mxu0
        %v1397 = vadd.f32 0.0, %v1396
        %v1398 = vpop.f32.mrb[0].mxu0
        %v1399 = vpop.f32.mrb[0].mxu0
        %v1400 = vadd.f32 0.0, %v1399
        %v1401 = vpop.f32.mrb[0].mxu0
        %1402 = vmatprep.mubr.bf16.mxu0 0
        %1403 = vmatmul.mubr.bf16.gmra.mrb[0].mxu0 %v759
        %v1404 = vpop.f32.mrb[0].mxu0
        %v1405 = vadd.f32 0.0, %v1404
        %v1406 = vpop.f32.mrb[0].mxu0
        %v1407 = vpop.f32.mrb[0].mxu0
        %v1408 = vadd.f32 0.0, %v1407
        %v1409 = vpop.f32.mrb[0].mxu0
        %1410 = vmatprep.mubr.bf16.mxu0 0
        %1411 = vmatmul.mubr.bf16.gmra.mrb[0].mxu0 %v760
        %v1412 = vpop.f32.mrb[0].mxu0
        %v1413 = vadd.f32 0.0, %v1412
        %v1414 = vpop.f32.mrb[0].mxu0
        %v1415 = vpop.f32.mrb[0].mxu0
        %v1416 = vadd.f32 0.0, %v1415
        %v1417 = vpop.f32.mrb[0].mxu0
        %1418 = vmatprep.mubr.bf16.mxu0 0
        %1419 = vmatmul.mubr.bf16.gmra.mrb[0].mxu0 %v761
        %v1420 = vpop.f32.mrb[0].mxu0
        %v1421 = vadd.f32 0.0, %v1420
        %v1422 = vpop.f32.mrb[0].mxu0
        %v1423 = vpop.f32.mrb[0].mxu0
        %v1424 = vadd.f32 0.0, %v1423
        %v1425 = vpop.f32.mrb[0].mxu0
        %1426 = vmatprep.mubr.bf16.mxu0 0
        %1427 = vmatmul.mubr.bf16.gmra.mrb[0].mxu0 %v762
        %v1428 = vpop.f32.mrb[0].mxu0
        %v1429 = vadd.f32 0.0, %v1428
        %v1430 = vpop.f32.mrb[0].mxu0
        %v1431 = vpop.f32.mrb[0].mxu0
        %v1432 = vadd.f32 0.0, %v1431
        %v1433 = vpop.f32.mrb[0].mxu0
        %1434 = vmatprep.mubr.bf16.mxu0 0
        %1435 = vmatmul.mubr.bf16.gmra.mrb[0].mxu0 %v763
        %v1436 = vpop.f32.mrb[0].mxu0
        %v1437 = vadd.f32 0.0, %v1436
        %v1438 = vpop.f32.mrb[0].mxu0
        %v1439 = vpop.f32.mrb[0].mxu0
        %v1440 = vadd.f32 0.0, %v1439
        %v1441 = vpop.f32.mrb[0].mxu0
        %1442 = vmatprep.mubr.bf16.mxu0 0
        %1443 = vmatmul.mubr.bf16.gmra.mrb[0].mxu0 %v764
        %v1444 = vpop.f32.mrb[0].mxu0
        %v1445 = vadd.f32 0.0, %v1444
        %v1446 = vpop.f32.mrb[0].mxu0
        %v1447 = vpop.f32.mrb[0].mxu0
        %v1448 = vadd.f32 0.0, %v1447
        %v1449 = vpop.f32.mrb[0].mxu0
        %1450 = vmatprep.mubr.bf16.mxu0 0
        %1451 = vmatmul.mubr.bf16.gmra.mrb[0].mxu0 %v765
        %v1452 = vpop.f32.mrb[0].mxu0
        %v1453 = vadd.f32 0.0, %v1452
        %v1454 = vpop.f32.mrb[0].mxu0
        %v1455 = vpop.f32.mrb[0].mxu0
        %v1456 = vadd.f32 0.0, %v1455
        %v1457 = vpop.f32.mrb[0].mxu0
        %1458 = vdwg.mxu0
        %v1459 = vld [vmem:[%s412] sm:$0xf]
        %v1460 = vpack.c.bf16 %v1400, %v1397
        %v1461 = vpack.c.bf16 %v1408, %v1405
        %v1462 = vpack.c.bf16 %v1416, %v1413
        %v1463 = vpack.c.bf16 %v1424, %v1421
        %v1464 = vpack.c.bf16 %v1432, %v1429
        %v1465 = vpack.c.bf16 %v1440, %v1437
        %v1466 = vpack.c.bf16 %v1448, %v1445
        %v1467 = vpack.c.bf16 %v1456, %v1453
        %v1469 = vlaneseq
        %v1470 = vshrl.u32 %v1469, 7
        %v1471 = vsub.s32 0, %v1470
        %v1472 = vrot.slane %v1208, %v1471
        %1474 = vmatprep.subr.bf16.mxu0 0
        %1475 = vmatpush1.bf16.msra.mxu0 %v1460
        %1476 = vmatprep.subr.bf16.mxu0 0
        %1477 = vmatpush1.bf16.msra.mxu0 %v1461
        %1478 = vmatprep.subr.bf16.mxu0 0
        %1479 = vmatpush1.bf16.msra.mxu0 %v1462
        %1480 = vmatprep.subr.bf16.mxu0 0
        %1481 = vmatpush1.bf16.msra.mxu0 %v1463
        %1482 = vmatprep.subr.bf16.mxu0 0
        %1483 = vmatpush1.bf16.msra.mxu0 %v1464
        %1484 = vmatprep.subr.bf16.mxu0 0
        %1485 = vmatpush1.bf16.msra.mxu0 %v1465
        %1486 = vmatprep.subr.bf16.mxu0 0
        %1487 = vmatpush1.bf16.msra.mxu0 %v1466
        %1488 = vmatprep.subr.bf16.mxu0 0
        %1489 = vmatpush1.bf16.msra.mxu0 %v1467
        %1490 = vmatprep.subr.bf16.mxu0 0
        %1491 = vmatpush1.bf16.msra.mxu0 0
        %1492 = vmatprep.subr.bf16.mxu0 0
        %1493 = vmatpush1.bf16.msra.mxu0 0
        %1494 = vmatprep.subr.bf16.mxu0 0
        %1495 = vmatpush1.bf16.msra.mxu0 0
        %1496 = vmatprep.subr.bf16.mxu0 0
        %1497 = vmatpush1.bf16.msra.mxu0 0
        %1498 = vmatprep.subr.bf16.mxu0 0
        %1499 = vmatpush1.bf16.msra.mxu0 0
        %1500 = vmatprep.subr.bf16.mxu0 0
        %1501 = vmatpush1.bf16.msra.mxu0 0
        %1502 = vmatprep.subr.bf16.mxu0 0
        %1503 = vmatpush1.bf16.msra.mxu0 0
        %1504 = vmatprep.subr.bf16.mxu0 0
        %1505 = vmatpush1.bf16.msra.mxu0 0
        %1506 = vmatprep.mubr.bf16.mxu0 0
        %1507 = vmatmul.mubr.bf16.gmra.mrb[0].mxu0 %v1459
        %v1508 = vpop.f32.mrb[0].mxu0
        %v1509 = vadd.f32 %v1472, %v1508
        %v1510 = vpop.f32.mrb[0].mxu0
        %v1511 = vpop.f32.mrb[0].mxu0
        %v1512 = vpop.f32.mrb[0].mxu0
        %1513 = vdwg.mxu0
        %1514 = vmax.xlane.f32.xlu0 %v1509
        %v1515 = vpop.xlane.xlu0 %1514
        %v1516 = vsub.f32 %v1509, %v1515
        %v1517 = vmul.f32 %v1516, 1.442695
        %v1518 = vpow.pop %v1517
        %1519 = vadd.xlane.f32.xlu0 %v1518
        %v1520 = vpop.xlane.xlu0 %1519
        %v1521 = vlog2.pop %v1520
        %v1522 = vmul.f32 %v1521, 0.6931472
        %v1523 = vsub.f32 %v1516, %v1522
        %1524 = vst [vmem:[%s468] sm:$0xff] %v1523
        %s1525 = sand.u32 %s243, 1
        %s1526 = scalar_lea.sflag [#allocation4], %s1525
        %s1527 = sand.u32 %s243, 1
        %s1528 = smul.addr %s1527, 8
        %s1529 = scalar_lea.vmem [#allocation13], %s1528
        // Predicated region
        $region81: #{tpu_custom_call.1} parent=55 // pred_check
          %p1530 = pneg %p253
        $region82: #{tpu_custom_call.1} parent=55 // pred_check_branch
          %1532 = sbr.rel (%p1530) target = $region84
        $region83: #{tpu_custom_call.1} parent=55 // pred_region
          %s1534 = ssub.s32 128, 128
          %1535 = vsyncadd %s1526, %s1534
          %s1536 = smul.addr %s31, 128
          %s1537 = scalar_lea.hbm %s9, %s1536
          %s1539 = sshll.u32 %s1529, 4
          %s1540 = int_to_ptr.vmem [resolvable:$true] %s1539
          %1542 = dma.vmem_to_hbm [thread:$0]  %s1540, 128, %s1537, %s1526
        $region84: #{tpu_custom_call.1} parent=55 // pred_fallthru
          _
      $region56: #{tpu_custom_call.1} parent=5 // pred_fallthru
        _
      %p1543 = scmp.le.s32.totalorder 2, %s26
      // Predicated region
      $region85: #{tpu_custom_call.1} parent=5 // pred_check
        %p1544 = pneg %p1543
      $region86: #{tpu_custom_call.1} parent=5 // pred_check_branch
        %1546 = sbr.rel (%p1544) target = $region88
      $region87: #{tpu_custom_call.1} parent=5 // pred_region
        %s1547 = ssub.s32 %s26, 2
        // Predicated region
        $region89: #{tpu_custom_call.1} parent=87 // pred_check
          %p1548 = pneg %p259
        $region90: #{tpu_custom_call.1} parent=87 // pred_check_branch
          %1550 = sbr.rel (%p1548) target = $region92
        $region91: #{tpu_custom_call.1} parent=87 // pred_region
          %s1551 = sand.u32 %s244, 1
          %s1552 = scalar_lea.sflag [#allocation4], %s1551
          %s1553 = sand.u32 %s244, 1
          %s1554 = smul.addr %s1553, 8
          %s1555 = scalar_lea.vmem [#allocation13], %s1554
          %1556 = dma.done %s1552, 128
        $region92: #{tpu_custom_call.1} parent=87 // pred_fallthru
          _
      $region88: #{tpu_custom_call.1} parent=5 // pred_fallthru
        _
    $region6: #{tpu_custom_call.1} parent=1 // loop_footer
      %s30 = sadd.s32 1, %s26
    $region7: #{tpu_custom_call.1} parent=1 // loop_footer_branch
      %25 = sbr.rel target = $region3
    $region8: #{tpu_custom_call.1} parent=1 // loop_exit
      _
    %1557 = vsyncpa [#allocation3], 1
    %s1558 = scalar_lea.sflag [#allocation3], 1
    %1559 = vsyncpa %s1558, 1
    %1560 = vsyncpa [#allocation6], 1
    %s1561 = scalar_lea.sflag [#allocation6], 1
    %1562 = vsyncpa %s1561, 1
    %1563 = vsyncpa [#allocation9], 1
    %1564 = vsyncpa [#allocation12], 1
    %1565 = vsyncpa [#allocation4], 1
    %s1566 = scalar_lea.sflag [#allocation4], 1
    %1567 = vsyncpa %s1566, 1

</llo_original>
